<compile_context>
chip_gen: v7x
topology: tpu7x:2x2x1
jax: 0.10.0
libtpu: 0.0.40
codegen_flags: <defaults>
</compile_context>

<pallas_src>
import jax
import jax.numpy as jnp
import numpy as np
from jax.experimental import pallas as pl
from jax.experimental.pallas import tpu as pltpu


def _round_up(x, m):
    return (x + m - 1) // m * m


# ---------------- fused Pallas kernel ----------------

def fused_encoder_kernel(a_ref, x_ref, w1_ref, b1_ref, w2_ref, b2_ref, p_ref,
                         out_ref, h0_ref, h1_ref, acc_ref):
    """Grid = (num_layers, row_tiles, k_tiles); k (neighbor-sum) axis innermost.

    Per (layer l, row-tile m): accumulate A_hat[m, k] @ h_{l-1}[k] over k, then
    apply the GIN MLP + ReLU and write the row tile into the ping-pong VMEM
    activation buffer. On the last layer, also accumulate P[:, m] @ h_l into the
    grid-resident pooled output block.
    """
    l = pl.program_id(0)
    m = pl.program_id(1)
    k = pl.program_id(2)
    nl = pl.num_programs(0)
    nk = pl.num_programs(2)

    tm = acc_ref.shape[0]
    tk = a_ref.shape[1]

    # int8 adjacency tile widened for the bf16 MXU matmul (via f32 for robust
    # lowering; the per-step VPU cast hides under the A-tile DMA).
    a_bf = a_ref[...].astype(jnp.float32).astype(jnp.bfloat16)

    even_layer = (l % 2) == 0
    k_off = pl.multiple_of(k * tk, tk)

    def accumulate(src_bf16):
        part = jnp.dot(a_bf, src_bf16, preferred_element_type=jnp.float32)

        @pl.when(k == 0)
        def _():
            acc_ref[...] = part

        @pl.when(k != 0)
        def _():
            acc_ref[...] += part

    # Exactly one branch is taken; only that branch loads its (tk, dpad) tile.
    @pl.when(l == 0)
    def _():
        accumulate(x_ref[...])

    @pl.when(jnp.logical_and(l > 0, even_layer))
    def _():
        accumulate(h0_ref[pl.ds(k_off, tk), :])

    @pl.when(jnp.logical_and(l > 0, jnp.logical_not(even_layer)))
    def _():
        accumulate(h1_ref[pl.ds(k_off, tk), :])

    @pl.when(k == nk - 1)
    def _():
        h = acc_ref[...]                                            # f32 (tm, dpad)
        h = jnp.dot(h.astype(jnp.bfloat16), w1_ref[0],
                    preferred_element_type=jnp.float32) + b1_ref[0]
        h = jnp.maximum(h, 0.0)
        h = jnp.dot(h.astype(jnp.bfloat16), w2_ref[0],
                    preferred_element_type=jnp.float32) + b2_ref[0]
        h = jnp.maximum(h, 0.0)            # outer F.relu in Encoder.forward
        h_bf = h.astype(jnp.bfloat16)

        m_off = pl.multiple_of(m * tm, tm)

        @pl.when(even_layer)
        def _():
            h1_ref[pl.ds(m_off, tm), :] = h_bf

        @pl.when(jnp.logical_not(even_layer))
        def _():
            h0_ref[pl.ds(m_off, tm), :] = h_bf

        # fused global_add_pool epilogue on the last layer, accumulating
        # directly into the grid-resident output block (constant index map).
        @pl.when(l == nl - 1)
        def _():
            pooled = jnp.dot(p_ref[...], h, preferred_element_type=jnp.float32)

            @pl.when(m == 0)
            def _():
                out_ref[...] = pooled

            @pl.when(m != 0)
            def _():
                out_ref[...] += pooled


# ---------------- wrapper ----------------

def encoder_forward_pallas(x, edge_index, batch, params, num_graphs, *,
                           tile_n=256):
    """Pallas Encoder.forward. x: (N, F) f32, edge_index: (2, E) i32, batch: (N,) i32.

    tile_n sizes the square adjacency tiles; 256 is a good default, sweep up to
    512 on v6e (128 MiB VMEM). It is clamped for tiny graphs.
    """
    n, f = x.shape
    dim = params[0][2].shape[0]        # W2 is (dim, dim)
    num_layers = len(params)

    dpad = _round_up(max(f, dim), 128)             # lane-dense feature dim
    tile_n = _round_up(tile_n, 128)
    tile_n = min(tile_n, _round_up(n, 128))        # don't over-tile tiny graphs
    npad = _round_up(n, tile_n)                    # node dim to tile multiple
    gpad = _round_up(num_graphs, 8)                # sublane multiple

    # A_hat = A + I (self term folded), message direction src -> dst; int8 is
    # exact for small integer multiplicities. Padded rows/cols stay zero.
    src_idx = edge_index[0]
    dst_idx = edge_index[1]
    a = jnp.zeros((npad, npad), jnp.float32)
    a = a.at[dst_idx, src_idx].add(1.0)
    a = a.at[jnp.arange(n), jnp.arange(n)].add(1.0)
    a = a.astype(jnp.int8)

    # node features zero-padded to (npad, dpad), bf16 (feeds bf16 aggregation)
    xp = jnp.zeros((npad, dpad), jnp.bfloat16).at[:n, :f].set(
        x.astype(jnp.bfloat16))

    # pooling matrix P[g, n] = 1[batch[n] == g]; padded columns are zero
    p = jnp.zeros((gpad, npad), jnp.float32)
    p = p.at[batch, jnp.arange(n)].set(1.0)

    # stack + zero-pad per-layer MLP weights to a common (dpad, dpad)
    w1s, b1s, w2s, b2s = [], [], [], []
    for (w1, b1, w2, b2) in params:
        w1s.append(jnp.zeros((dpad, dpad), jnp.float32)
                   .at[:w1.shape[0], :w1.shape[1]].set(w1).astype(jnp.bfloat16))
        b1s.append(jnp.zeros((1, dpad), jnp.float32).at[:, :b1.shape[1]].set(b1))
        w2s.append(jnp.zeros((dpad, dpad), jnp.float32)
                   .at[:w2.shape[0], :w2.shape[1]].set(w2).astype(jnp.bfloat16))
        b2s.append(jnp.zeros((1, dpad), jnp.float32).at[:, :b2.shape[1]].set(b2))
    w1s = jnp.stack(w1s)
    b1s = jnp.stack(b1s)
    w2s = jnp.stack(w2s)
    b2s = jnp.stack(b2s)

    mt = npad // tile_n
    kt = npad // tile_n
    grid = (num_layers, mt, kt)

    # explicit VMEM budget: 2x double-buffered streamed blocks + resident scratch
    stream_bytes = (tile_n * tile_n * 1           # A block (int8)
                    + tile_n * dpad * 2           # x block (bf16)
                    + 2 * dpad * dpad * 2         # W1, W2 blocks (bf16)
                    + 2 * dpad * 4                # b1, b2 (f32)
                    + gpad * tile_n * 4           # P block (f32)
                    + gpad * dpad * 4)            # out block (f32)
    scratch_bytes = 2 * npad * dpad * 2 + tile_n * dpad * 4
    vmem_limit = int(2 * stream_bytes + scratch_bytes) + (4 << 20)

    out = pl.pallas_call(
        fused_encoder_kernel,
        out_shape=jax.ShapeDtypeStruct((gpad, dpad), jnp.float32),
        grid_spec=pltpu.PrefetchScalarGridSpec(
            num_scalar_prefetch=0,
            grid=grid,
            in_specs=[
                # adjacency tiles stream per (row-tile, k-tile)
                pl.BlockSpec((tile_n, tile_n), lambda l, m, k: (m, k)),
                # x only streamed for layer 0; pinned to block 0 afterwards
                pl.BlockSpec((tile_n, dpad),
                             lambda l, m, k: (jnp.where(l == 0, k, 0), 0)),
                # per-layer weights: constant block index within a layer
                pl.BlockSpec((1, dpad, dpad), lambda l, m, k: (l, 0, 0)),
                pl.BlockSpec((1, 1, dpad), lambda l, m, k: (l, 0, 0)),
                pl.BlockSpec((1, dpad, dpad), lambda l, m, k: (l, 0, 0)),
                pl.BlockSpec((1, 1, dpad), lambda l, m, k: (l, 0, 0)),
                # pooling matrix column tile follows the row tile
                pl.BlockSpec((gpad, tile_n), lambda l, m, k: (0, m)),
            ],
            out_specs=pl.BlockSpec((gpad, dpad), lambda l, m, k: (0, 0)),
            scratch_shapes=[
                pltpu.VMEM((npad, dpad), jnp.bfloat16),   # activation ping
                pltpu.VMEM((npad, dpad), jnp.bfloat16),   # activation pong
                pltpu.VMEM((tile_n, dpad), jnp.float32),  # neighbor-sum accumulator
            ],
        ),
        compiler_params=pltpu.CompilerParams(
            # cross-layer/cross-tile deps flow through core-resident scratch;
            # do NOT mark any axis "parallel" without restructuring.
            dimension_semantics=("arbitrary", "arbitrary", "arbitrary"),
            vmem_limit_bytes=vmem_limit,
        ),
    )(a, xp, w1s, b1s, w2s, b2s, p)

    return out[:num_graphs, :dim]


# ---------------- params / reference ----------------

def init_encoder_params(key, num_features, dim, num_gc_layers):
    """Deterministic init of the GIN MLP weights (Linear(in,dim), ReLU, Linear(dim,dim))."""
    params = []
    for i in range(num_gc_layers):
        in_dim = num_features if i == 0 else dim
        key, k1, k2, k3, k4 = jax.random.split(key, 5)
        s1 = 1.0 / np.sqrt(in_dim)
        s2 = 1.0 / np.sqrt(dim)
        w1 = jax.random.uniform(k1, (in_dim, dim), jnp.float32, -s1, s1)
        b1 = jax.random.uniform(k2, (1, dim), jnp.float32, -s1, s1)
        w2 = jax.random.uniform(k3, (dim, dim), jnp.float32, -s2, s2)
        b2 = jax.random.uniform(k4, (1, dim), jnp.float32, -s2, s2)
        params.append((w1, b1, w2, b2))
    return params


def encoder_reference(x, edge_index, batch, params, num_graphs):
    """Pure-JAX f32 reference matching PyTorch semantics, for verification."""
    n = x.shape[0]
    a = jnp.zeros((n, n), jnp.float32).at[edge_index[1], edge_index[0]].add(1.0)
    p = jax.nn.one_hot(batch, num_graphs, dtype=jnp.float32).T
    h = x
    for (w1, b1, w2, b2) in params:
        t = h + a @ h
        t = jnp.maximum(t @ w1 + b1, 0.0)
        t = t @ w2 + b2
        h = jnp.maximum(t, 0.0)
    return p @ h


if __name__ == "__main__":
    num_nodes = 200          # > 128 so the demo exercises the 2x2 tile grid
    num_features = 8
    dim = 32
    num_gc_layers = 3
    num_graphs = 2
    num_edges = 400

    key = jax.random.PRNGKey(0)
    kx, ke, kp = jax.random.split(key, 3)

    x = jax.random.normal(kx, (num_nodes, num_features), jnp.float32)
    edge_index = jax.random.randint(ke, (2, num_edges), 0, num_nodes, jnp.int32)
    # two graphs: first 100 nodes -> graph 0, last 100 nodes -> graph 1
    batch = jnp.concatenate([jnp.zeros((100,), jnp.int32),
                             jnp.ones((100,), jnp.int32)])

    params = init_encoder_params(kp, num_features, dim, num_gc_layers)

    out = encoder_forward_pallas(x, edge_index, batch, params, num_graphs,
                                 tile_n=128)
    out = jax.block_until_ready(out)

    ref = jax.block_until_ready(
        encoder_reference(x, edge_index, batch, params, num_graphs))

    assert out.shape == (num_graphs, dim), out.shape
    # bf16 activations / weights inside the kernel -> loosened tolerance vs f32 ref
    np.testing.assert_allclose(np.asarray(out), np.asarray(ref),
                               rtol=5e-2, atol=5e-2)

    print("KERNEL_OK")
</pallas_src>

<mosaic_0001>
module attributes {stable_mosaic.version = 11 : i64} {
  func.func @fused_encoder_kernel(%arg0: i32, %arg1: i32, %arg2: i32, %arg3: memref<128x128xi8, #tpu.memory_space<vmem>>, %arg4: memref<128x128xbf16, #tpu.memory_space<vmem>>, %arg5: memref<1x128x128xbf16, #tpu.memory_space<vmem>>, %arg6: memref<1x1x128xf32, #tpu.memory_space<vmem>>, %arg7: memref<1x128x128xbf16, #tpu.memory_space<vmem>>, %arg8: memref<1x1x128xf32, #tpu.memory_space<vmem>>, %arg9: memref<8x128xf32, #tpu.memory_space<vmem>>, %arg10: memref<8x128xf32, #tpu.memory_space<vmem>>, %arg11: memref<256x128xbf16, #tpu.memory_space<vmem>>, %arg12: memref<256x128xbf16, #tpu.memory_space<vmem>>, %arg13: memref<128x128xf32, #tpu.memory_space<vmem>>) attributes {dimension_semantics = [#tpu.dimension_semantics<arbitrary>, #tpu.dimension_semantics<arbitrary>, #tpu.dimension_semantics<arbitrary>], iteration_bounds = array<i64: 3, 2, 2>, scalar_prefetch = 0 : i64, scratch_operands = 3 : i64, tpu.core_type = #tpu.core_type<tc>, window_params = [{transform_indices = @transform_0, window_bounds = array<i64: 128, 128>}, {transform_indices = @transform_1, window_bounds = array<i64: 128, 128>}, {transform_indices = @transform_2, window_bounds = array<i64: 1, 128, 128>}, {transform_indices = @transform_3, window_bounds = array<i64: 1, 1, 128>}, {transform_indices = @transform_4, window_bounds = array<i64: 1, 128, 128>}, {transform_indices = @transform_5, window_bounds = array<i64: 1, 1, 128>}, {transform_indices = @transform_6, window_bounds = array<i64: 8, 128>}, {pipeline_mode = #tpu.pipeline_mode<synchronous>, transform_indices = @transform_7, window_bounds = array<i64: 8, 128>}]} {
    %c0 = arith.constant 0 : index
    %c0_0 = arith.constant 0 : index
    %0 = vector.load %arg3[%c0, %c0_0] : memref<128x128xi8, #tpu.memory_space<vmem>>, vector<128x128xi8>
    %1 = arith.sitofp %0 : vector<128x128xi8> to vector<128x128xf32>
    %2 = arith.truncf %1 : vector<128x128xf32> to vector<128x128xbf16>
    %c2_i32 = arith.constant 2 : i32
    %c0_i32 = arith.constant 0 : i32
    %3 = arith.cmpi eq, %c2_i32, %c0_i32 : i32
    %c1_i32 = arith.constant 1 : i32
    %4 = arith.select %3, %c1_i32, %c2_i32 : i32
    %5 = arith.remsi %arg0, %4 : i32
    %c0_i32_1 = arith.constant 0 : i32
    %6 = arith.cmpi ne, %5, %c0_i32_1 : i32
    %c0_i32_2 = arith.constant 0 : i32
    %7 = arith.cmpi slt, %5, %c0_i32_2 : i32
    %c0_i32_3 = arith.constant 0 : i32
    %8 = arith.cmpi slt, %4, %c0_i32_3 : i32
    %9 = arith.xori %7, %8 : i1
    %10 = arith.andi %9, %6 : i1
    %11 = arith.addi %5, %4 : i32
    %12 = arith.select %10, %11, %5 : i32
    %c0_i32_4 = arith.constant 0 : i32
    %13 = arith.cmpi eq, %12, %c0_i32_4 : i32
    %c128_i32 = arith.constant 128 : i32
    %14 = arith.muli %arg2, %c128_i32 : i32
    %15 = tpu.assume_multiple %14, 128 : i32
    %c0_i32_5 = arith.constant 0 : i32
    %16 = arith.cmpi eq, %arg0, %c0_i32_5 : i32
    %17 = arith.extui %16 : i1 to i32
    %c0_i32_6 = arith.constant 0 : i32
    %18 = arith.cmpi ne, %17, %c0_i32_6 : i32
    scf.if %18 {
      %c0_13 = arith.constant 0 : index
      %c0_14 = arith.constant 0 : index
      %31 = vector.load %arg4[%c0_13, %c0_14] : memref<128x128xbf16, #tpu.memory_space<vmem>>, vector<128x128xbf16>
      %cst = arith.constant dense<0.000000e+00> : vector<128x128xf32>
      %32 = tpu.matmul %2, %31, %cst {dimension_numbers = #tpu.dot_dimension_numbers<[1], [0], [0], [1], [0, 0, 1, 1], [], []>} : vector<128x128xbf16>, vector<128x128xbf16>, vector<128x128xf32> -> vector<128x128xf32>
      %c0_i32_15 = arith.constant 0 : i32
      %33 = arith.cmpi eq, %arg2, %c0_i32_15 : i32
      %34 = arith.extui %33 : i1 to i32
      %c0_i32_16 = arith.constant 0 : i32
      %35 = arith.cmpi ne, %34, %c0_i32_16 : i32
      scf.if %35 {
        %c0_19 = arith.constant 0 : index
        %c0_20 = arith.constant 0 : index
        %39 = vector.load %arg13[%c0_19, %c0_20] : memref<128x128xf32, #tpu.memory_space<vmem>>, vector<128x128xf32>
        tpu.vector_store %arg13[%c0_19, %c0_20], %32 {strides = array<i32>} : memref<128x128xf32, #tpu.memory_space<vmem>>, vector<128x128xf32>,
      } else {
      }
      %c0_i32_17 = arith.constant 0 : i32
      %36 = arith.cmpi ne, %arg2, %c0_i32_17 : i32
      %37 = arith.extui %36 : i1 to i32
      %c0_i32_18 = arith.constant 0 : i32
      %38 = arith.cmpi ne, %37, %c0_i32_18 : i32
      scf.if %38 {
        %c0_19 = arith.constant 0 : index
        %c0_20 = arith.constant 0 : index
        %39 = vector.load %arg13[%c0_19, %c0_20] : memref<128x128xf32, #tpu.memory_space<vmem>>, vector<128x128xf32>
        %40 = arith.addf %39, %32 : vector<128x128xf32>
        %c0_21 = arith.constant 0 : index
        %c0_22 = arith.constant 0 : index
        %41 = vector.load %arg13[%c0_21, %c0_22] : memref<128x128xf32, #tpu.memory_space<vmem>>, vector<128x128xf32>
        tpu.vector_store %arg13[%c0_21, %c0_22], %40 {strides = array<i32>} : memref<128x128xf32, #tpu.memory_space<vmem>>, vector<128x128xf32>,
      } else {
      }
    } else {
    }
    %c0_i32_7 = arith.constant 0 : i32
    %19 = arith.cmpi sgt, %arg0, %c0_i32_7 : i32
    %20 = arith.andi %19, %13 : i1
    %21 = arith.extui %20 : i1 to i32
    %c0_i32_8 = arith.constant 0 : i32
    %22 = arith.cmpi ne, %21, %c0_i32_8 : i32
    scf.if %22 {
      %31 = arith.index_cast %15 : i32 to index
      %c0_13 = arith.constant 0 : index
      %32 = vector.load %arg11[%31, %c0_13] : memref<256x128xbf16, #tpu.memory_space<vmem>>, vector<128x128xbf16>
      %cst = arith.constant dense<0.000000e+00> : vector<128x128xf32>
      %33 = tpu.matmul %2, %32, %cst {dimension_numbers = #tpu.dot_dimension_numbers<[1], [0], [0], [1], [0, 0, 1, 1], [], []>} : vector<128x128xbf16>, vector<128x128xbf16>, vector<128x128xf32> -> vector<128x128xf32>
      %c0_i32_14 = arith.constant 0 : i32
      %34 = arith.cmpi eq, %arg2, %c0_i32_14 : i32
      %35 = arith.extui %34 : i1 to i32
      %c0_i32_15 = arith.constant 0 : i32
      %36 = arith.cmpi ne, %35, %c0_i32_15 : i32
      scf.if %36 {
        %c0_18 = arith.constant 0 : index
        %c0_19 = arith.constant 0 : index
        %40 = vector.load %arg13[%c0_18, %c0_19] : memref<128x128xf32, #tpu.memory_space<vmem>>, vector<128x128xf32>
        tpu.vector_store %arg13[%c0_18, %c0_19], %33 {strides = array<i32>} : memref<128x128xf32, #tpu.memory_space<vmem>>, vector<128x128xf32>,
      } else {
      }
      %c0_i32_16 = arith.constant 0 : i32
      %37 = arith.cmpi ne, %arg2, %c0_i32_16 : i32
      %38 = arith.extui %37 : i1 to i32
      %c0_i32_17 = arith.constant 0 : i32
      %39 = arith.cmpi ne, %38, %c0_i32_17 : i32
      scf.if %39 {
        %c0_18 = arith.constant 0 : index
        %c0_19 = arith.constant 0 : index
        %40 = vector.load %arg13[%c0_18, %c0_19] : memref<128x128xf32, #tpu.memory_space<vmem>>, vector<128x128xf32>
        %41 = arith.addf %40, %33 : vector<128x128xf32>
        %c0_20 = arith.constant 0 : index
        %c0_21 = arith.constant 0 : index
        %42 = vector.load %arg13[%c0_20, %c0_21] : memref<128x128xf32, #tpu.memory_space<vmem>>, vector<128x128xf32>
        tpu.vector_store %arg13[%c0_20, %c0_21], %41 {strides = array<i32>} : memref<128x128xf32, #tpu.memory_space<vmem>>, vector<128x128xf32>,
      } else {
      }
    } else {
    }
    %c0_i32_9 = arith.constant 0 : i32
    %23 = arith.cmpi sgt, %arg0, %c0_i32_9 : i32
    %true = arith.constant true
    %24 = arith.xori %13, %true : i1
    %25 = arith.andi %23, %24 : i1
    %26 = arith.extui %25 : i1 to i32
    %c0_i32_10 = arith.constant 0 : i32
    %27 = arith.cmpi ne, %26, %c0_i32_10 : i32
    scf.if %27 {
      %31 = arith.index_cast %15 : i32 to index
      %c0_13 = arith.constant 0 : index
      %32 = vector.load %arg12[%31, %c0_13] : memref<256x128xbf16, #tpu.memory_space<vmem>>, vector<128x128xbf16>
      %cst = arith.constant dense<0.000000e+00> : vector<128x128xf32>
      %33 = tpu.matmul %2, %32, %cst {dimension_numbers = #tpu.dot_dimension_numbers<[1], [0], [0], [1], [0, 0, 1, 1], [], []>} : vector<128x128xbf16>, vector<128x128xbf16>, vector<128x128xf32> -> vector<128x128xf32>
      %c0_i32_14 = arith.constant 0 : i32
      %34 = arith.cmpi eq, %arg2, %c0_i32_14 : i32
      %35 = arith.extui %34 : i1 to i32
      %c0_i32_15 = arith.constant 0 : i32
      %36 = arith.cmpi ne, %35, %c0_i32_15 : i32
      scf.if %36 {
        %c0_18 = arith.constant 0 : index
        %c0_19 = arith.constant 0 : index
        %40 = vector.load %arg13[%c0_18, %c0_19] : memref<128x128xf32, #tpu.memory_space<vmem>>, vector<128x128xf32>
        tpu.vector_store %arg13[%c0_18, %c0_19], %33 {strides = array<i32>} : memref<128x128xf32, #tpu.memory_space<vmem>>, vector<128x128xf32>,
      } else {
      }
      %c0_i32_16 = arith.constant 0 : i32
      %37 = arith.cmpi ne, %arg2, %c0_i32_16 : i32
      %38 = arith.extui %37 : i1 to i32
      %c0_i32_17 = arith.constant 0 : i32
      %39 = arith.cmpi ne, %38, %c0_i32_17 : i32
      scf.if %39 {
        %c0_18 = arith.constant 0 : index
        %c0_19 = arith.constant 0 : index
        %40 = vector.load %arg13[%c0_18, %c0_19] : memref<128x128xf32, #tpu.memory_space<vmem>>, vector<128x128xf32>
        %41 = arith.addf %40, %33 : vector<128x128xf32>
        %c0_20 = arith.constant 0 : index
        %c0_21 = arith.constant 0 : index
        %42 = vector.load %arg13[%c0_20, %c0_21] : memref<128x128xf32, #tpu.memory_space<vmem>>, vector<128x128xf32>
        tpu.vector_store %arg13[%c0_20, %c0_21], %41 {strides = array<i32>} : memref<128x128xf32, #tpu.memory_space<vmem>>, vector<128x128xf32>,
      } else {
      }
    } else {
    }
    %c1_i32_11 = arith.constant 1 : i32
    %28 = arith.cmpi eq, %arg2, %c1_i32_11 : i32
    %29 = arith.extui %28 : i1 to i32
    %c0_i32_12 = arith.constant 0 : i32
    %30 = arith.cmpi ne, %29, %c0_i32_12 : i32
    scf.if %30 {
      %c0_13 = arith.constant 0 : index
      %c0_14 = arith.constant 0 : index
      %31 = vector.load %arg13[%c0_13, %c0_14] : memref<128x128xf32, #tpu.memory_space<vmem>>, vector<128x128xf32>
      %32 = arith.truncf %31 : vector<128x128xf32> to vector<128x128xbf16>
      %c0_15 = arith.constant 0 : index
      %c0_16 = arith.constant 0 : index
      %c0_17 = arith.constant 0 : index
      %33 = vector.load %arg5[%c0_15, %c0_16, %c0_17] : memref<1x128x128xbf16, #tpu.memory_space<vmem>>, vector<1x128x128xbf16>
      %34 = vector.shape_cast %33 : vector<1x128x128xbf16> to vector<128x128xbf16>
      %cst = arith.constant dense<0.000000e+00> : vector<128x128xf32>
      %35 = tpu.matmul %32, %34, %cst {dimension_numbers = #tpu.dot_dimension_numbers<[1], [0], [0], [1], [0, 0, 1, 1], [], []>} : vector<128x128xbf16>, vector<128x128xbf16>, vector<128x128xf32> -> vector<128x128xf32>
      %c0_18 = arith.constant 0 : index
      %c0_19 = arith.constant 0 : index
      %c0_20 = arith.constant 0 : index
      %36 = vector.load %arg6[%c0_18, %c0_19, %c0_20] : memref<1x1x128xf32, #tpu.memory_space<vmem>>, vector<1x1x128xf32>
      %37 = vector.shape_cast %36 : vector<1x1x128xf32> to vector<1x128xf32>
      %38 = vector.broadcast %37 : vector<1x128xf32> to vector<128x128xf32>
      %39 = arith.addf %35, %38 : vector<128x128xf32>
      %cst_21 = arith.constant 0.000000e+00 : f32
      %40 = vector.broadcast %cst_21 : f32 to vector<128x128xf32>
      %41 = arith.maximumf %39, %40 : vector<128x128xf32>
      %42 = arith.truncf %41 : vector<128x128xf32> to vector<128x128xbf16>
      %c0_22 = arith.constant 0 : index
      %c0_23 = arith.constant 0 : index
      %c0_24 = arith.constant 0 : index
      %43 = vector.load %arg7[%c0_22, %c0_23, %c0_24] : memref<1x128x128xbf16, #tpu.memory_space<vmem>>, vector<1x128x128xbf16>
      %44 = vector.shape_cast %43 : vector<1x128x128xbf16> to vector<128x128xbf16>
      %cst_25 = arith.constant dense<0.000000e+00> : vector<128x128xf32>
      %45 = tpu.matmul %42, %44, %cst_25 {dimension_numbers = #tpu.dot_dimension_numbers<[1], [0], [0], [1], [0, 0, 1, 1], [], []>} : vector<128x128xbf16>, vector<128x128xbf16>, vector<128x128xf32> -> vector<128x128xf32>
      %c0_26 = arith.constant 0 : index
      %c0_27 = arith.constant 0 : index
      %c0_28 = arith.constant 0 : index
      %46 = vector.load %arg8[%c0_26, %c0_27, %c0_28] : memref<1x1x128xf32, #tpu.memory_space<vmem>>, vector<1x1x128xf32>
      %47 = vector.shape_cast %46 : vector<1x1x128xf32> to vector<1x128xf32>
      %48 = vector.broadcast %47 : vector<1x128xf32> to vector<128x128xf32>
      %49 = arith.addf %45, %48 : vector<128x128xf32>
      %cst_29 = arith.constant 0.000000e+00 : f32
      %50 = vector.broadcast %cst_29 : f32 to vector<128x128xf32>
      %51 = arith.maximumf %49, %50 : vector<128x128xf32>
      %52 = arith.truncf %51 : vector<128x128xf32> to vector<128x128xbf16>
      %c128_i32_30 = arith.constant 128 : i32
      %53 = arith.muli %arg1, %c128_i32_30 : i32
      %54 = tpu.assume_multiple %53, 128 : i32
      %55 = arith.extui %13 : i1 to i32
      %c0_i32_31 = arith.constant 0 : i32
      %56 = arith.cmpi ne, %55, %c0_i32_31 : i32
      scf.if %56 {
        %63 = arith.index_cast %54 : i32 to index
        %c0_36 = arith.constant 0 : index
        %64 = vector.load %arg12[%63, %c0_36] : memref<256x128xbf16, #tpu.memory_space<vmem>>, vector<128x128xbf16>
        tpu.vector_store %arg12[%63, %c0_36], %52 {strides = array<i32>} : memref<256x128xbf16, #tpu.memory_space<vmem>>, vector<128x128xbf16>,
      } else {
      }
      %true_32 = arith.constant true
      %57 = arith.xori %13, %true_32 : i1
      %58 = arith.extui %57 : i1 to i32
      %c0_i32_33 = arith.constant 0 : i32
      %59 = arith.cmpi ne, %58, %c0_i32_33 : i32
      scf.if %59 {
        %63 = arith.index_cast %54 : i32 to index
        %c0_36 = arith.constant 0 : index
        %64 = vector.load %arg11[%63, %c0_36] : memref<256x128xbf16, #tpu.memory_space<vmem>>, vector<128x128xbf16>
        tpu.vector_store %arg11[%63, %c0_36], %52 {strides = array<i32>} : memref<256x128xbf16, #tpu.memory_space<vmem>>, vector<128x128xbf16>,
      } else {
      }
      %c2_i32_34 = arith.constant 2 : i32
      %60 = arith.cmpi eq, %arg0, %c2_i32_34 : i32
      %61 = arith.extui %60 : i1 to i32
      %c0_i32_35 = arith.constant 0 : i32
      %62 = arith.cmpi ne, %61, %c0_i32_35 : i32
      scf.if %62 {
        %c0_36 = arith.constant 0 : index
        %c0_37 = arith.constant 0 : index
        %63 = vector.load %arg9[%c0_36, %c0_37] : memref<8x128xf32, #tpu.memory_space<vmem>>, vector<8x128xf32>
        %cst_38 = arith.constant dense<0.000000e+00> : vector<8x128xf32>
        %64 = tpu.matmul %63, %51, %cst_38 {dimension_numbers = #tpu.dot_dimension_numbers<[1], [0], [0], [1], [0, 0, 1, 1], [], []>} : vector<8x128xf32>, vector<128x128xf32>, vector<8x128xf32> -> vector<8x128xf32>
        %c0_i32_39 = arith.constant 0 : i32
        %65 = arith.cmpi eq, %arg1, %c0_i32_39 : i32
        %66 = arith.extui %65 : i1 to i32
        %c0_i32_40 = arith.constant 0 : i32
        %67 = arith.cmpi ne, %66, %c0_i32_40 : i32
        scf.if %67 {
          %c0_43 = arith.constant 0 : index
          %c0_44 = arith.constant 0 : index
          %71 = vector.load %arg10[%c0_43, %c0_44] : memref<8x128xf32, #tpu.memory_space<vmem>>, vector<8x128xf32>
          tpu.vector_store %arg10[%c0_43, %c0_44], %64 {strides = array<i32>} : memref<8x128xf32, #tpu.memory_space<vmem>>, vector<8x128xf32>,
        } else {
        }
        %c0_i32_41 = arith.constant 0 : i32
        %68 = arith.cmpi ne, %arg1, %c0_i32_41 : i32
        %69 = arith.extui %68 : i1 to i32
        %c0_i32_42 = arith.constant 0 : i32
        %70 = arith.cmpi ne, %69, %c0_i32_42 : i32
        scf.if %70 {
          %c0_43 = arith.constant 0 : index
          %c0_44 = arith.constant 0 : index
          %71 = vector.load %arg10[%c0_43, %c0_44] : memref<8x128xf32, #tpu.memory_space<vmem>>, vector<8x128xf32>
          %72 = arith.addf %71, %64 : vector<8x128xf32>
          %c0_45 = arith.constant 0 : index
          %c0_46 = arith.constant 0 : index
          %73 = vector.load %arg10[%c0_45, %c0_46] : memref<8x128xf32, #tpu.memory_space<vmem>>, vector<8x128xf32>
          tpu.vector_store %arg10[%c0_45, %c0_46], %72 {strides = array<i32>} : memref<8x128xf32, #tpu.memory_space<vmem>>, vector<8x128xf32>,
        } else {
        }
      } else {
      }
    } else {
    }
    return
  }
  func.func @transform_0(%arg0: i32, %arg1: i32, %arg2: i32) -> (i32, i32) {
    %c0_i32 = arith.constant 0 : i32
    return %arg1, %arg2 : i32, i32
  }
  func.func @transform_1(%arg0: i32, %arg1: i32, %arg2: i32) -> (i32, i32) {
    %c0_i32 = arith.constant 0 : i32
    %0 = arith.cmpi eq, %arg0, %c0_i32 : i32
    %c0_i32_0 = arith.constant 0 : i32
    %1 = arith.select %0, %arg2, %c0_i32_0 : i32
    %c0_i32_1 = arith.constant 0 : i32
    %c0_i32_2 = arith.constant 0 : i32
    return %1, %c0_i32_1 : i32, i32
  }
  func.func @transform_2(%arg0: i32, %arg1: i32, %arg2: i32) -> (i32, i32, i32) {
    %c0_i32 = arith.constant 0 : i32
    %c0_i32_0 = arith.constant 0 : i32
    %c0_i32_1 = arith.constant 0 : i32
    return %arg0, %c0_i32, %c0_i32_0 : i32, i32, i32
  }
  func.func @transform_3(%arg0: i32, %arg1: i32, %arg2: i32) -> (i32, i32, i32) {
    %c0_i32 = arith.constant 0 : i32
    %c0_i32_0 = arith.constant 0 : i32
    %c0_i32_1 = arith.constant 0 : i32
    return %arg0, %c0_i32, %c0_i32_0 : i32, i32, i32
  }
  func.func @transform_4(%arg0: i32, %arg1: i32, %arg2: i32) -> (i32, i32, i32) {
    %c0_i32 = arith.constant 0 : i32
    %c0_i32_0 = arith.constant 0 : i32
    %c0_i32_1 = arith.constant 0 : i32
    return %arg0, %c0_i32, %c0_i32_0 : i32, i32, i32
  }
  func.func @transform_5(%arg0: i32, %arg1: i32, %arg2: i32) -> (i32, i32, i32) {
    %c0_i32 = arith.constant 0 : i32
    %c0_i32_0 = arith.constant 0 : i32
    %c0_i32_1 = arith.constant 0 : i32
    return %arg0, %c0_i32, %c0_i32_0 : i32, i32, i32
  }
  func.func @transform_6(%arg0: i32, %arg1: i32, %arg2: i32) -> (i32, i32) {
    %c0_i32 = arith.constant 0 : i32
    %c0_i32_0 = arith.constant 0 : i32
    return %c0_i32, %arg1 : i32, i32
  }
  func.func @transform_7(%arg0: i32, %arg1: i32, %arg2: i32) -> (i32, i32) {
    %c0_i32 = arith.constant 0 : i32
    %c0_i32_0 = arith.constant 0 : i32
    %c0_i32_1 = arith.constant 0 : i32
    return %c0_i32, %c0_i32_0 : i32, i32
  }
}

</mosaic_0001>

<llo_original>
// kernel: tpu_custom_call.1
$region0: #{tpu_custom_call.1}
  #allocation0 [shape = 'u32[]', space=smem, size = 0x4, offset = 0x4, fixed_abs, tag = 'smem constant byte address 0x4 - core index']
  #allocation1 [shape = 'u32[144,128]{1,0:T(1,128)}', space=vmem, size = 0x12000, scoped, tag = 'internal scratch']
  #allocation2 [shape = 'bf16[256,128]{1,0:T(16,128)(2,1)}', space=vmem, size = 0x10000, scoped, tag = 'scratch operand']
  #allocation3 [shape = 'bf16[256,128]{1,0:T(16,128)(2,1)}', space=vmem, size = 0x10000, scoped, tag = 'scratch operand']
  #allocation4 [shape = 'f32[128,128]{1,0:T(8,128)}', space=vmem, size = 0x10000, scoped, tag = 'scratch operand']
  %s0 = inlined_call_operand.hbm [shape: s8[256,256], index: 0, kind: input, shape index: {}]
  %s1 = inlined_call_operand.hbm [shape: bf16[256,128], index: 1, kind: input, shape index: {}]
  %s2 = inlined_call_operand.hbm [shape: bf16[3,128,128], index: 2, kind: input, shape index: {}]
  %s3 = inlined_call_operand.vmem [shape: f32[3,1,128], index: 3, kind: input, shape index: {}]
  %s4 = inlined_call_operand.hbm [shape: bf16[3,128,128], index: 4, kind: input, shape index: {}]
  %s5 = inlined_call_operand.vmem [shape: f32[3,1,128], index: 5, kind: input, shape index: {}]
  %s6 = inlined_call_operand.vmem [shape: f32[8,256], index: 6, kind: input, shape index: {}]
  %s7 = inlined_call_operand.hbm [shape: f32[8,128], index: 7, kind: output, shape index: {}]
  %s8 = sld [smem:[#allocation0]]
  $region137: #{tpu_custom_call.1} parent=0
    _
  %s10 = ssub.s32 1, %s8
  %s11 = scalar_select 0, %s10, %s8
  $region1: #{tpu_custom_call.1} parent=0
    #allocation5 [shape = 'u8[32768]{0}', space=vmem, size = 0x8000, scoped, tag = 'input window, operand 0']
    #allocation6 [shape = 's32[2]{0}', space=sflag, size = 0x8, scoped, tag = 'scoped memory for tpu_custom_call.1']
    #allocation7 [shape = 's32[2]{0}', space=sflag, size = 0x8, scoped, tag = 'scoped memory for tpu_custom_call.1']
    #allocation8 [shape = 'u8[65536]{0}', space=vmem, size = 0x10000, scoped, tag = 'input window, operand 1']
    #allocation9 [shape = 's32[2]{0}', space=sflag, size = 0x8, scoped, tag = 'scoped memory for tpu_custom_call.1']
    #allocation10 [shape = 'u8[65536]{0}', space=vmem, size = 0x10000, scoped, tag = 'input window, operand 2']
    #allocation11 [shape = 'u8[65536]{0}', space=vmem, size = 0x10000, scoped, tag = 'input window, operand 4']
    #allocation12 [shape = 's32[2]{0}', space=sflag, size = 0x8, scoped, tag = 'scoped memory for tpu_custom_call.1']
    #allocation13 [shape = 'u8[4096]{0}', space=vmem, size = 0x1000, scoped, tag = 'output window, operand 0, single buffered']
    %12 = vsyncpa [#allocation6], 0
    %s13 = scalar_lea.sflag [#allocation6], 1
    %14 = vsyncpa %s13, 0
    %15 = vsyncpa [#allocation9], 0
    %s16 = scalar_lea.sflag [#allocation9], 1
    %17 = vsyncpa %s16, 0
    %18 = vsyncpa [#allocation12], 0
    %s19 = scalar_lea.sflag [#allocation12], 1
    %20 = vsyncpa %s19, 0
    %21 = vsyncpa [#allocation7], 0
    loop: start=0, step=1, limit=14
    $region2: #{tpu_custom_call.1} parent=1 // loop_pre_header
      _
    $region3: #{tpu_custom_call.1} parent=1 // loop_header
      %s23 = sphi 0, %s27
      %p24 = scmp.ge.s32.totalorder %s23, 14
      %s30 = sphi 0, %s49
      %s31 = sphi 0, %s45
      %s32 = sphi 0, %s41
      %s33 = sphi 0, %s30
      %s34 = sphi 0, %s31
      %s35 = sphi 0, %s32
      %s36 = sphi 0, %s33
      %s37 = sphi 0, %s34
      %s38 = sphi 0, %s35
      %s54 = sphi 0, %s56
      %s57 = sphi 0, %s54
      %s58 = sphi 0, %s57
      %s74 = sphi 0, %s58
      %s84 = sphi 0, %s86
      %s87 = sphi 0, %s84
      %s88 = sphi 0, %s87
      %s104 = sphi 0, %s88
      %s110 = sphi 0, %s112
      %s113 = sphi 0, %s110
      %s114 = sphi 0, %s113
      %s130 = sphi 0, %s114
      %s136 = sphi 0, %s138
      %s139 = sphi 0, %s136
      %s140 = sphi 0, %s139
      %s156 = sphi 0, %s140
      %s162 = sphi 0, %s164
      %s165 = sphi 0, %s162
      %s166 = sphi 0, %s165
      %s182 = sphi 0, %s166
      %s188 = sphi 0, %s190
      %s191 = sphi 0, %s188
      %s192 = sphi 0, %s191
      %s208 = sphi 0, %s192
      %s214 = sphi 0, %s216
      %s217 = sphi 0, %s214
      %s218 = sphi 0, %s217
      %s234 = sphi 0, %s218
      %s238 = sphi 0, %s238
      %s240 = sphi 0, %s238
      %s241 = sphi 0, %s240
      %s255 = sphi 0, %s241
    $region4: #{tpu_custom_call.1} parent=1 // loop_header_branch
      %26 = sbr.rel (%p24) target = $region8
    $region5: #{tpu_custom_call.1} parent=1 // loop_body
      %s28 = ssub.s32 %s23, 1
      %s29 = ssub.s32 %s23, 2
      %s39 = sadd.s32 1, %s32
      %p40 = scmp.ge.s32.totalorder %s39, 2
      %s41 = scalar_select %p40, 0, %s39
      %s42 = sadd.s32 1, %s31
      %s43 = scalar_select %p40, %s42, %s31
      %p44 = scmp.ge.s32.totalorder %s43, 2
      %s45 = scalar_select %p44, 0, %s43
      %s46 = sadd.s32 1, %s30
      %s47 = scalar_select %p44, %s46, %s30
      %p48 = scmp.ge.s32.totalorder %s47, 3
      %s49 = scalar_select %p48, 0, %s47
      %s50 = ssub.s32 %s31, %s45
      %s51 = ssub.s32 %s32, %s41
      %s52 = sor.u32 %s50, %s51
      %p53 = scmp.eq.s32.totalorder %s52, 0
      %s55 = sadd.s32 %s54, 1
      %s56 = scalar_select %p53, %s54, %s55
      %p59 = pneg %p53
      %p60 = scmp.eq.s32.totalorder %s23, 11
      %p61 = por %p59, %p60
      %p62 = scmp.ne.s32.totalorder %s54, %s57
      %p63 = scmp.eq.s32.totalorder %s23, 0
      %p64 = por %p62, %p63
      %p65 = scmp.ne.s32.totalorder %s54, %s57
      %p66 = scmp.eq.s32.totalorder %s28, 11
      %p67 = por %p65, %p66
      %p68 = scmp.ne.s32.totalorder %s57, %s58
      %p69 = scmp.eq.s32.totalorder %s28, 0
      %p70 = por %p68, %p69
      %p71 = scmp.ne.s32.totalorder %s57, %s58
      %p72 = scmp.eq.s32.totalorder %s29, 11
      %p73 = por %p71, %p72
      %p75 = scmp.ne.s32.totalorder %s58, %s74
      %p76 = scmp.eq.s32.totalorder %s29, 0
      %p77 = por %p75, %p76
      %p78 = scmp.eq.s32.totalorder %s30, 0
      %s79 = scalar_select %p78, %s32, 0
      %p80 = scmp.eq.s32.totalorder %s49, 0
      %s81 = scalar_select %p80, %s41, 0
      %s82 = ssub.s32 %s79, %s81
      %p83 = scmp.eq.s32.totalorder %s82, 0
      %s85 = sadd.s32 %s84, 1
      %s86 = scalar_select %p83, %s84, %s85
      %p89 = pneg %p83
      %p90 = scmp.eq.s32.totalorder %s23, 11
      %p91 = por %p89, %p90
      %p92 = scmp.ne.s32.totalorder %s84, %s87
      %p93 = scmp.eq.s32.totalorder %s23, 0
      %p94 = por %p92, %p93
      %p95 = scmp.ne.s32.totalorder %s84, %s87
      %p96 = scmp.eq.s32.totalorder %s28, 11
      %p97 = por %p95, %p96
      %p98 = scmp.ne.s32.totalorder %s87, %s88
      %p99 = scmp.eq.s32.totalorder %s28, 0
      %p100 = por %p98, %p99
      %p101 = scmp.ne.s32.totalorder %s87, %s88
      %p102 = scmp.eq.s32.totalorder %s29, 11
      %p103 = por %p101, %p102
      %p105 = scmp.ne.s32.totalorder %s88, %s104
      %p106 = scmp.eq.s32.totalorder %s29, 0
      %p107 = por %p105, %p106
      %s108 = ssub.s32 %s30, %s49
      %p109 = scmp.eq.s32.totalorder %s108, 0
      %s111 = sadd.s32 %s110, 1
      %s112 = scalar_select %p109, %s110, %s111
      %p115 = pneg %p109
      %p116 = scmp.eq.s32.totalorder %s23, 11
      %p117 = por %p115, %p116
      %p118 = scmp.ne.s32.totalorder %s110, %s113
      %p119 = scmp.eq.s32.totalorder %s23, 0
      %p120 = por %p118, %p119
      %p121 = scmp.ne.s32.totalorder %s110, %s113
      %p122 = scmp.eq.s32.totalorder %s28, 11
      %p123 = por %p121, %p122
      %p124 = scmp.ne.s32.totalorder %s113, %s114
      %p125 = scmp.eq.s32.totalorder %s28, 0
      %p126 = por %p124, %p125
      %p127 = scmp.ne.s32.totalorder %s113, %s114
      %p128 = scmp.eq.s32.totalorder %s29, 11
      %p129 = por %p127, %p128
      %p131 = scmp.ne.s32.totalorder %s114, %s130
      %p132 = scmp.eq.s32.totalorder %s29, 0
      %p133 = por %p131, %p132
      %s134 = ssub.s32 %s30, %s49
      %p135 = scmp.eq.s32.totalorder %s134, 0
      %s137 = sadd.s32 %s136, 1
      %s138 = scalar_select %p135, %s136, %s137
      %p141 = pneg %p135
      %p142 = scmp.eq.s32.totalorder %s23, 11
      %p143 = por %p141, %p142
      %p144 = scmp.ne.s32.totalorder %s136, %s139
      %p145 = scmp.eq.s32.totalorder %s23, 0
      %p146 = por %p144, %p145
      %p147 = scmp.ne.s32.totalorder %s136, %s139
      %p148 = scmp.eq.s32.totalorder %s28, 11
      %p149 = por %p147, %p148
      %p150 = scmp.ne.s32.totalorder %s139, %s140
      %p151 = scmp.eq.s32.totalorder %s28, 0
      %p152 = por %p150, %p151
      %p153 = scmp.ne.s32.totalorder %s139, %s140
      %p154 = scmp.eq.s32.totalorder %s29, 11
      %p155 = por %p153, %p154
      %p157 = scmp.ne.s32.totalorder %s140, %s156
      %p158 = scmp.eq.s32.totalorder %s29, 0
      %p159 = por %p157, %p158
      %s160 = ssub.s32 %s30, %s49
      %p161 = scmp.eq.s32.totalorder %s160, 0
      %s163 = sadd.s32 %s162, 1
      %s164 = scalar_select %p161, %s162, %s163
      %p167 = pneg %p161
      %p168 = scmp.eq.s32.totalorder %s23, 11
      %p169 = por %p167, %p168
      %p170 = scmp.ne.s32.totalorder %s162, %s165
      %p171 = scmp.eq.s32.totalorder %s23, 0
      %p172 = por %p170, %p171
      %p173 = scmp.ne.s32.totalorder %s162, %s165
      %p174 = scmp.eq.s32.totalorder %s28, 11
      %p175 = por %p173, %p174
      %p176 = scmp.ne.s32.totalorder %s165, %s166
      %p177 = scmp.eq.s32.totalorder %s28, 0
      %p178 = por %p176, %p177
      %p179 = scmp.ne.s32.totalorder %s165, %s166
      %p180 = scmp.eq.s32.totalorder %s29, 11
      %p181 = por %p179, %p180
      %p183 = scmp.ne.s32.totalorder %s166, %s182
      %p184 = scmp.eq.s32.totalorder %s29, 0
      %p185 = por %p183, %p184
      %s186 = ssub.s32 %s30, %s49
      %p187 = scmp.eq.s32.totalorder %s186, 0
      %s189 = sadd.s32 %s188, 1
      %s190 = scalar_select %p187, %s188, %s189
      %p193 = pneg %p187
      %p194 = scmp.eq.s32.totalorder %s23, 11
      %p195 = por %p193, %p194
      %p196 = scmp.ne.s32.totalorder %s188, %s191
      %p197 = scmp.eq.s32.totalorder %s23, 0
      %p198 = por %p196, %p197
      %p199 = scmp.ne.s32.totalorder %s188, %s191
      %p200 = scmp.eq.s32.totalorder %s28, 11
      %p201 = por %p199, %p200
      %p202 = scmp.ne.s32.totalorder %s191, %s192
      %p203 = scmp.eq.s32.totalorder %s28, 0
      %p204 = por %p202, %p203
      %p205 = scmp.ne.s32.totalorder %s191, %s192
      %p206 = scmp.eq.s32.totalorder %s29, 11
      %p207 = por %p205, %p206
      %p209 = scmp.ne.s32.totalorder %s192, %s208
      %p210 = scmp.eq.s32.totalorder %s29, 0
      %p211 = por %p209, %p210
      %s212 = ssub.s32 %s31, %s45
      %p213 = scmp.eq.s32.totalorder %s212, 0
      %s215 = sadd.s32 %s214, 1
      %s216 = scalar_select %p213, %s214, %s215
      %p219 = pneg %p213
      %p220 = scmp.eq.s32.totalorder %s23, 11
      %p221 = por %p219, %p220
      %p222 = scmp.ne.s32.totalorder %s214, %s217
      %p223 = scmp.eq.s32.totalorder %s23, 0
      %p224 = por %p222, %p223
      %p225 = scmp.ne.s32.totalorder %s214, %s217
      %p226 = scmp.eq.s32.totalorder %s28, 11
      %p227 = por %p225, %p226
      %p228 = scmp.ne.s32.totalorder %s217, %s218
      %p229 = scmp.eq.s32.totalorder %s28, 0
      %p230 = por %p228, %p229
      %p231 = scmp.ne.s32.totalorder %s217, %s218
      %p232 = scmp.eq.s32.totalorder %s29, 11
      %p233 = por %p231, %p232
      %p235 = scmp.ne.s32.totalorder %s218, %s234
      %p236 = scmp.eq.s32.totalorder %s29, 0
      %p237 = por %p235, %p236
      %s239 = sadd.s32 %s238, 1
      %p242 = scmp.eq.s32.totalorder %s23, 11
      %p243 = scmp.ne.s32.totalorder %s238, %s240
      %p244 = scmp.eq.s32.totalorder %s23, 0
      %p245 = por %p243, %p244
      %p246 = scmp.ne.s32.totalorder %s238, %s240
      %p247 = scmp.eq.s32.totalorder %s28, 11
      %p248 = por %p246, %p247
      %p249 = scmp.ne.s32.totalorder %s240, %s241
      %p250 = scmp.eq.s32.totalorder %s28, 0
      %p251 = por %p249, %p250
      %p252 = scmp.ne.s32.totalorder %s240, %s241
      %p253 = scmp.eq.s32.totalorder %s29, 11
      %p254 = por %p252, %p253
      %p256 = scmp.ne.s32.totalorder %s241, %s255
      %p257 = scmp.eq.s32.totalorder %s29, 0
      %p258 = por %p256, %p257
      %p259 = scmp.le.s32.totalorder 1, %s23
      %p260 = scmp.lt.s32.totalorder %s23, 13
      %p261 = pnand %p259, %p260
      %p262 = pneg %p261
      // Predicated region
      $region9: #{tpu_custom_call.1} parent=5 // pred_check
        _
      $region10: #{tpu_custom_call.1} parent=5 // pred_check_branch
        %264 = sbr.rel (%p261) target = $region12
      $region11: #{tpu_custom_call.1} parent=5 // pred_region
        %s265 = ssub.s32 %s23, 1
      $region12: #{tpu_custom_call.1} parent=5 // pred_fallthru
        _
      %p266 = scmp.lt.s32.totalorder %s23, 12
      // Predicated region
      $region13: #{tpu_custom_call.1} parent=5 // pred_check
        %p267 = pneg %p266
      $region14: #{tpu_custom_call.1} parent=5 // pred_check_branch
        %269 = sbr.rel (%p267) target = $region16
      $region15: #{tpu_custom_call.1} parent=5 // pred_region
        // Predicated region
        $region17: #{tpu_custom_call.1} parent=15 // pred_check
          %p270 = pneg %p64
        $region18: #{tpu_custom_call.1} parent=15 // pred_check_branch
          %272 = sbr.rel (%p270) target = $region20
        $region19: #{tpu_custom_call.1} parent=15 // pred_region
          %s273 = sand.u32 %s54, 1
          %s274 = scalar_lea.sflag [#allocation6], %s273
          %s275 = sand.u32 %s54, 1
          %s276 = smul.addr %s275, 32
          %s277 = scalar_lea.vmem [#allocation5], %s276
          %s278 = smul.u32 4, %s31
          %s280 = ssub.s32 512, 512
          %281 = vsyncadd %s274, %s280
          %s282 = smul.addr %s278, 2
          %s283 = sadd.s32 %s32, %s282
          %s284 = smul.addr %s283, 128
          %s285 = scalar_lea.hbm %s0, %s284
          %s286 = sshll.u32 %s277, 4
          %s287 = int_to_ptr.vmem [resolvable:$true] %s286
          %292 = dma.hbm_to_vmem [thread:$0]  %s285, 512, %s287, %s274, 256, 128, 8
        $region20: #{tpu_custom_call.1} parent=15 // pred_fallthru
          _
        // Predicated region
        $region21: #{tpu_custom_call.1} parent=15 // pred_check
          %p293 = pneg %p94
        $region22: #{tpu_custom_call.1} parent=15 // pred_check_branch
          %295 = sbr.rel (%p293) target = $region24
        $region23: #{tpu_custom_call.1} parent=15 // pred_region
          %s296 = sand.u32 %s23, 1
          %s297 = scalar_lea.sflag [#allocation9], %s296
          %s298 = sand.u32 %s84, 1
          %s299 = smul.addr %s298, 64
          %s300 = scalar_lea.vmem [#allocation8], %s299
          %p301 = scmp.eq.s32.totalorder %s30, 0
          %s302 = scalar_select %p301, %s32, 0
          %s303 = smul.u32 16, %s302
          %s305 = ssub.s32 1024, 1024
          %306 = vsyncadd %s297, %s305
          %s307 = smul.addr %s303, 64
          %s308 = scalar_lea.hbm %s1, %s307
          %s309 = sshll.u32 %s300, 4
          %s310 = int_to_ptr.vmem [resolvable:$true] %s309
          %315 = dma.hbm_to_vmem [thread:$0]  %s308, 1024, %s310, %s297, 64, 64, 4
        $region24: #{tpu_custom_call.1} parent=15 // pred_fallthru
          _
        // Predicated region
        $region25: #{tpu_custom_call.1} parent=15 // pred_check
          %p316 = pneg %p120
        $region26: #{tpu_custom_call.1} parent=15 // pred_check_branch
          %318 = sbr.rel (%p316) target = $region28
        $region27: #{tpu_custom_call.1} parent=15 // pred_region
          %s319 = sand.u32 %s23, 1
          %s320 = scalar_lea.sflag [#allocation9], %s319
          %s321 = sand.u32 %s110, 1
          %s322 = smul.addr %s321, 64
          %s323 = scalar_lea.vmem [#allocation10], %s322
          %s325 = ssub.s32 1024, 1024
          %326 = vsyncadd %s320, %s325
          %s327 = smul.addr %s30, 16
          %s328 = smul.addr %s327, 64
          %s329 = scalar_lea.hbm %s2, %s328
          %s330 = sshll.u32 %s323, 4
          %s331 = int_to_ptr.vmem [resolvable:$true] %s330
          %336 = dma.hbm_to_vmem [thread:$0]  %s329, 1024, %s331, %s320, 64, 64, 4
        $region28: #{tpu_custom_call.1} parent=15 // pred_fallthru
          _
        // Predicated region
        $region29: #{tpu_custom_call.1} parent=15 // pred_check
          %p337 = pneg %p146
        $region30: #{tpu_custom_call.1} parent=15 // pred_check_branch
          %339 = sbr.rel (%p337) target = $region32
        $region31: #{tpu_custom_call.1} parent=15 // pred_region
          %p340 = scmp.lt.s32.totalorder %s30, 2
          %s341 = scalar_select %p340, %s30, 2
          %s342 = scalar_lea.vmem %s3, %s341
        $region32: #{tpu_custom_call.1} parent=15 // pred_fallthru
          _
        // Predicated region
        $region33: #{tpu_custom_call.1} parent=15 // pred_check
          %p343 = pneg %p172
        $region34: #{tpu_custom_call.1} parent=15 // pred_check_branch
          %345 = sbr.rel (%p343) target = $region36
        $region35: #{tpu_custom_call.1} parent=15 // pred_region
          %s346 = sand.u32 %s162, 1
          %s347 = scalar_lea.sflag [#allocation12], %s346
          %s348 = sand.u32 %s162, 1
          %s349 = smul.addr %s348, 64
          %s350 = scalar_lea.vmem [#allocation11], %s349
          %s352 = ssub.s32 1024, 1024
          %353 = vsyncadd %s347, %s352
          %s354 = smul.addr %s30, 16
          %s355 = smul.addr %s354, 64
          %s356 = scalar_lea.hbm %s4, %s355
          %s357 = sshll.u32 %s350, 4
          %s358 = int_to_ptr.vmem [resolvable:$true] %s357
          %363 = dma.hbm_to_vmem [thread:$0]  %s356, 1024, %s358, %s347, 64, 64, 4
        $region36: #{tpu_custom_call.1} parent=15 // pred_fallthru
          _
        // Predicated region
        $region37: #{tpu_custom_call.1} parent=15 // pred_check
          %p364 = pneg %p198
        $region38: #{tpu_custom_call.1} parent=15 // pred_check_branch
          %366 = sbr.rel (%p364) target = $region40
        $region39: #{tpu_custom_call.1} parent=15 // pred_region
          %p367 = scmp.lt.s32.totalorder %s30, 2
          %s368 = scalar_select %p367, %s30, 2
          %s369 = scalar_lea.vmem %s5, %s368
        $region40: #{tpu_custom_call.1} parent=15 // pred_fallthru
          _
        // Predicated region
        $region41: #{tpu_custom_call.1} parent=15 // pred_check
          %p370 = pneg %p224
        $region42: #{tpu_custom_call.1} parent=15 // pred_check_branch
          %372 = sbr.rel (%p370) target = $region44
        $region43: #{tpu_custom_call.1} parent=15 // pred_region
          %p373 = scmp.lt.s32.totalorder %s31, 1
          %s374 = scalar_select %p373, %s31, 1
          %s375 = smul.addr %s374, 8
          %s376 = scalar_lea.vmem %s6, %s375
        $region44: #{tpu_custom_call.1} parent=15 // pred_fallthru
          _
      $region16: #{tpu_custom_call.1} parent=5 // pred_fallthru
        _
      %p377 = scmp.le.s32.totalorder 1, %s23
      %p378 = scmp.lt.s32.totalorder %s23, 13
      %p379 = pnand %p377, %p378
      %p380 = pneg %p379
      // Predicated region
      $region45: #{tpu_custom_call.1} parent=5 // pred_check
        _
      $region46: #{tpu_custom_call.1} parent=5 // pred_check_branch
        %382 = sbr.rel (%p379) target = $region48
      $region47: #{tpu_custom_call.1} parent=5 // pred_region
        %s383 = ssub.s32 %s23, 1
        %s384 = sand.u32 %s57, 1
        %s385 = scalar_lea.sflag [#allocation6], %s384
        %s386 = sand.u32 %s57, 1
        %s387 = smul.addr %s386, 32
        %s388 = scalar_lea.vmem [#allocation5], %s387
        // Predicated region
        $region49: #{tpu_custom_call.1} parent=47 // pred_check
          %p389 = pneg %p70
        $region50: #{tpu_custom_call.1} parent=47 // pred_check_branch
          %391 = sbr.rel (%p389) target = $region52
        $region51: #{tpu_custom_call.1} parent=47 // pred_region
          %392 = dma.done %s385, 512
        $region52: #{tpu_custom_call.1} parent=47 // pred_fallthru
          _
        %s393 = sand.u32 %s28, 1
        %s394 = scalar_lea.sflag [#allocation9], %s393
        %s395 = sand.u32 %s87, 1
        %s396 = smul.addr %s395, 64
        %s397 = scalar_lea.vmem [#allocation8], %s396
        // Predicated region
        $region53: #{tpu_custom_call.1} parent=47 // pred_check
          %p398 = pneg %p100
        $region54: #{tpu_custom_call.1} parent=47 // pred_check_branch
          %400 = sbr.rel (%p398) target = $region56
        $region55: #{tpu_custom_call.1} parent=47 // pred_region
          %401 = dma.done %s394, 1024
        $region56: #{tpu_custom_call.1} parent=47 // pred_fallthru
          _
        %s402 = sand.u32 %s28, 1
        %s403 = scalar_lea.sflag [#allocation9], %s402
        %s404 = sand.u32 %s113, 1
        %s405 = smul.addr %s404, 64
        %s406 = scalar_lea.vmem [#allocation10], %s405
        // Predicated region
        $region57: #{tpu_custom_call.1} parent=47 // pred_check
          %p407 = pneg %p126
        $region58: #{tpu_custom_call.1} parent=47 // pred_check_branch
          %409 = sbr.rel (%p407) target = $region60
        $region59: #{tpu_custom_call.1} parent=47 // pred_region
          %410 = dma.done %s403, 1024
        $region60: #{tpu_custom_call.1} parent=47 // pred_fallthru
          _
        %s411 = sand.u32 %s165, 1
        %s412 = scalar_lea.sflag [#allocation12], %s411
        %s413 = sand.u32 %s165, 1
        %s414 = smul.addr %s413, 64
        %s415 = scalar_lea.vmem [#allocation11], %s414
        // Predicated region
        $region61: #{tpu_custom_call.1} parent=47 // pred_check
          %p416 = pneg %p178
        $region62: #{tpu_custom_call.1} parent=47 // pred_check_branch
          %418 = sbr.rel (%p416) target = $region64
        $region63: #{tpu_custom_call.1} parent=47 // pred_region
          %419 = dma.done %s412, 1024
        $region64: #{tpu_custom_call.1} parent=47 // pred_fallthru
          _
        %s420 = sand.u32 %s57, 1
        %s421 = scalar_lea.sflag [#allocation6], %s420
        %s422 = sand.u32 %s57, 1
        %s423 = smul.addr %s422, 32
        %s424 = scalar_lea.vmem [#allocation5], %s423
        %p425 = pneg %p70
        %p426 = pneg %p67
        %s427 = sand.u32 %s28, 1
        %s428 = scalar_lea.sflag [#allocation9], %s427
        %s429 = sand.u32 %s87, 1
        %s430 = smul.addr %s429, 64
        %s431 = scalar_lea.vmem [#allocation8], %s430
        %p432 = pneg %p100
        %p433 = pneg %p97
        %s434 = sand.u32 %s28, 1
        %s435 = scalar_lea.sflag [#allocation9], %s434
        %s436 = sand.u32 %s113, 1
        %s437 = smul.addr %s436, 64
        %s438 = scalar_lea.vmem [#allocation10], %s437
        %p439 = pneg %p126
        %p440 = pneg %p123
        %p441 = scmp.lt.s32.totalorder %s33, 2
        %s442 = scalar_select %p441, %s33, 2
        %s443 = scalar_lea.vmem %s3, %s442
        %p444 = pneg %p152
        %p445 = pneg %p149
        %s446 = sand.u32 %s165, 1
        %s447 = scalar_lea.sflag [#allocation12], %s446
        %s448 = sand.u32 %s165, 1
        %s449 = smul.addr %s448, 64
        %s450 = scalar_lea.vmem [#allocation11], %s449
        %p451 = pneg %p178
        %p452 = pneg %p175
        %p453 = scmp.lt.s32.totalorder %s33, 2
        %s454 = scalar_select %p453, %s33, 2
        %s455 = scalar_lea.vmem %s5, %s454
        %p456 = pneg %p204
        %p457 = pneg %p201
        %p458 = scmp.lt.s32.totalorder %s34, 1
        %s459 = scalar_select %p458, %s34, 1
        %s460 = smul.addr %s459, 8
        %s461 = scalar_lea.vmem %s6, %s460
        %p462 = pneg %p230
        %p463 = pneg %p227
        %p464 = pneg %p251
        %p465 = pneg %p248
        %s466 = smul.u32 4, %s34
        %p467 = scmp.eq.s32.totalorder %s33, 0
        %s468 = scalar_select %p467, %s35, 0
        %s469 = smul.u32 16, %s468
        %p470 = scmp.lt.s32.totalorder %s33, 2
        %s471 = scalar_select %p470, %s33, 2
        %s472 = scalar_lea.vmem %s3, %s471
        %p473 = scmp.lt.s32.totalorder %s33, 2
        %s474 = scalar_select %p473, %s33, 2
        %s475 = scalar_lea.vmem %s5, %s474
        %p476 = scmp.lt.s32.totalorder %s34, 1
        %s477 = scalar_select %p476, %s34, 1
        %s478 = smul.addr %s477, 8
        %s479 = scalar_lea.vmem %s6, %s478
        %v481 = vld [vmem:[%s388] sm:$0xff]
        %v482 = vld [vmem:[%s388 + $0x8] sm:$0xff]
        %v483 = vld [vmem:[%s388 + $0x10] sm:$0xff]
        %v484 = vld [vmem:[%s388 + $0x18] sm:$0xff]
        %v485 = vunpack.c.l.s8.bf16 %v481
        %v486 = vunpack.c.h.s8.bf16 %v481
        %v487 = vunpack.c.l.s8.bf16 %v482
        %v488 = vunpack.c.h.s8.bf16 %v482
        %v489 = vunpack.c.l.s8.bf16 %v483
        %v490 = vunpack.c.h.s8.bf16 %v483
        %v491 = vunpack.c.l.s8.bf16 %v484
        %v492 = vunpack.c.h.s8.bf16 %v484
        %p493 = scmp.lt.s32.totalorder %s33, 0
        %s494 = ssub.s32 0, %s33
        %s495 = scalar_select %p493, %s494, %s33
        %s496 = sand.u32 %s495, 1
        %s497 = ssub.s32 0, %s496
        %s498 = scalar_select %p493, %s497, %s496
        %p499 = scmp.ne.s32.totalorder %s498, 0
        %p500 = scmp.lt.s32.totalorder %s498, 0
        %p501 = pnand %p500, %p499
        %p502 = pneg %p501
        %s503 = sadd.s32 %s498, 2
        %s504 = scalar_select %p502, %s503, %s498
        %p505 = scmp.eq.s32.totalorder %s504, 0
        %s506 = smul.u32 %s35, 128
        %p507 = scmp.eq.s32.totalorder %s33, 0
        // Predicated region
        $region65: #{tpu_custom_call.1} parent=47 // pred_check
          %p508 = pneg %p507
        $region66: #{tpu_custom_call.1} parent=47 // pred_check_branch
          %510 = sbr.rel (%p508) target = $region68
        $region67: #{tpu_custom_call.1} parent=47 // pred_region
          %v511 = vld [vmem:[%s397] sm:$0xf]
          %v512 = vld [vmem:[%s397 + $0x4] sm:$0xf]
          %v513 = vld [vmem:[%s397 + $0x8] sm:$0xf]
          %v514 = vld [vmem:[%s397 + $0xc] sm:$0xf]
          %v515 = vld [vmem:[%s397 + $0x10] sm:$0xf]
          %v516 = vld [vmem:[%s397 + $0x14] sm:$0xf]
          %v517 = vld [vmem:[%s397 + $0x18] sm:$0xf]
          %v518 = vld [vmem:[%s397 + $0x1c] sm:$0xf]
          %v519 = vld [vmem:[%s397 + $0x20] sm:$0xf]
          %v520 = vld [vmem:[%s397 + $0x24] sm:$0xf]
          %v521 = vld [vmem:[%s397 + $0x28] sm:$0xf]
          %v522 = vld [vmem:[%s397 + $0x2c] sm:$0xf]
          %v523 = vld [vmem:[%s397 + $0x30] sm:$0xf]
          %v524 = vld [vmem:[%s397 + $0x34] sm:$0xf]
          %v525 = vld [vmem:[%s397 + $0x38] sm:$0xf]
          %v526 = vld [vmem:[%s397 + $0x3c] sm:$0xf]
          %v543 = vunpack.c.l.b16 %v511
          %v544 = vunpack.c.l.b16 %v512
          %v545 = vunpack.c.l.b16 %v513
          %v546 = vunpack.c.l.b16 %v514
          %v547 = vunpack.c.l.b16 %v515
          %v548 = vunpack.c.l.b16 %v516
          %v549 = vunpack.c.l.b16 %v517
          %v550 = vunpack.c.l.b16 %v518
          %v551 = vunpack.c.l.b16 %v519
          %v552 = vunpack.c.l.b16 %v520
          %v553 = vunpack.c.l.b16 %v521
          %v554 = vunpack.c.l.b16 %v522
          %v555 = vunpack.c.l.b16 %v523
          %v556 = vunpack.c.l.b16 %v524
          %v557 = vunpack.c.l.b16 %v525
          %v558 = vunpack.c.l.b16 %v526
          %v559 = vpack.c.b16 %v544, %v543
          %v560 = vpack.c.b16 %v546, %v545
          %v561 = vpack.c.b16 %v548, %v547
          %v562 = vpack.c.b16 %v550, %v549
          %v563 = vpack.c.b16 %v552, %v551
          %v564 = vpack.c.b16 %v554, %v553
          %v565 = vpack.c.b16 %v556, %v555
          %v566 = vpack.c.b16 %v558, %v557
          %575 = vmatprep.subr.bf16.mxu0 0
          %576 = vmatpush1.bf16.msra.mxu0 %v559
          %577 = vmatprep.subr.bf16.mxu0 0
          %578 = vmatpush1.bf16.msra.mxu0 %v560
          %579 = vmatprep.subr.bf16.mxu0 0
          %580 = vmatpush1.bf16.msra.mxu0 %v561
          %581 = vmatprep.subr.bf16.mxu0 0
          %582 = vmatpush1.bf16.msra.mxu0 %v562
          %583 = vmatprep.subr.bf16.mxu0 0
          %584 = vmatpush1.bf16.msra.mxu0 %v563
          %585 = vmatprep.subr.bf16.mxu0 0
          %586 = vmatpush1.bf16.msra.mxu0 %v564
          %587 = vmatprep.subr.bf16.mxu0 0
          %588 = vmatpush1.bf16.msra.mxu0 %v565
          %589 = vmatprep.subr.bf16.mxu0 0
          %590 = vmatpush1.bf16.msra.mxu0 %v566
          %591 = vmatprep.subr.bf16.mxu0 0
          %592 = vmatpush1.bf16.msra.mxu0 0
          %593 = vmatprep.subr.bf16.mxu0 0
          %594 = vmatpush1.bf16.msra.mxu0 0
          %595 = vmatprep.subr.bf16.mxu0 0
          %596 = vmatpush1.bf16.msra.mxu0 0
          %597 = vmatprep.subr.bf16.mxu0 0
          %598 = vmatpush1.bf16.msra.mxu0 0
          %599 = vmatprep.subr.bf16.mxu0 0
          %600 = vmatpush1.bf16.msra.mxu0 0
          %601 = vmatprep.subr.bf16.mxu0 0
          %602 = vmatpush1.bf16.msra.mxu0 0
          %603 = vmatprep.subr.bf16.mxu0 0
          %604 = vmatpush1.bf16.msra.mxu0 0
          %605 = vmatprep.subr.bf16.mxu0 0
          %606 = vmatpush1.bf16.msra.mxu0 0
          %607 = vmatprep.mubr.bf16.mxu0 0
          %608 = vmatmul.mubr.bf16.gmra.mrb[0].mxu0 %v485
          %v609 = vpop.f32.mrb[0].mxu0
          %v610 = vadd.f32 0.0, %v609
          %v611 = vpop.f32.mrb[0].mxu0
          %v612 = vpop.f32.mrb[0].mxu0
          %v613 = vadd.f32 0.0, %v612
          %v614 = vpop.f32.mrb[0].mxu0
          %615 = vmatprep.mubr.bf16.mxu0 0
          %616 = vmatmul.mubr.bf16.gmra.mrb[0].mxu0 %v486
          %v617 = vpop.f32.mrb[0].mxu0
          %v618 = vadd.f32 0.0, %v617
          %v619 = vpop.f32.mrb[0].mxu0
          %v620 = vpop.f32.mrb[0].mxu0
          %v621 = vadd.f32 0.0, %v620
          %v622 = vpop.f32.mrb[0].mxu0
          %623 = vmatprep.mubr.bf16.mxu0 0
          %624 = vmatmul.mubr.bf16.gmra.mrb[0].mxu0 %v487
          %v625 = vpop.f32.mrb[0].mxu0
          %v626 = vadd.f32 0.0, %v625
          %v627 = vpop.f32.mrb[0].mxu0
          %v628 = vpop.f32.mrb[0].mxu0
          %v629 = vadd.f32 0.0, %v628
          %v630 = vpop.f32.mrb[0].mxu0
          %631 = vmatprep.mubr.bf16.mxu0 0
          %632 = vmatmul.mubr.bf16.gmra.mrb[0].mxu0 %v488
          %v633 = vpop.f32.mrb[0].mxu0
          %v634 = vadd.f32 0.0, %v633
          %v635 = vpop.f32.mrb[0].mxu0
          %v636 = vpop.f32.mrb[0].mxu0
          %v637 = vadd.f32 0.0, %v636
          %v638 = vpop.f32.mrb[0].mxu0
          %639 = vmatprep.mubr.bf16.mxu0 0
          %640 = vmatmul.mubr.bf16.gmra.mrb[0].mxu0 %v489
          %v641 = vpop.f32.mrb[0].mxu0
          %v642 = vadd.f32 0.0, %v641
          %v643 = vpop.f32.mrb[0].mxu0
          %v644 = vpop.f32.mrb[0].mxu0
          %v645 = vadd.f32 0.0, %v644
          %v646 = vpop.f32.mrb[0].mxu0
          %647 = vmatprep.mubr.bf16.mxu0 0
          %648 = vmatmul.mubr.bf16.gmra.mrb[0].mxu0 %v490
          %v649 = vpop.f32.mrb[0].mxu0
          %v650 = vadd.f32 0.0, %v649
          %v651 = vpop.f32.mrb[0].mxu0
          %v652 = vpop.f32.mrb[0].mxu0
          %v653 = vadd.f32 0.0, %v652
          %v654 = vpop.f32.mrb[0].mxu0
          %655 = vmatprep.mubr.bf16.mxu0 0
          %656 = vmatmul.mubr.bf16.gmra.mrb[0].mxu0 %v491
          %v657 = vpop.f32.mrb[0].mxu0
          %v658 = vadd.f32 0.0, %v657
          %v659 = vpop.f32.mrb[0].mxu0
          %v660 = vpop.f32.mrb[0].mxu0
          %v661 = vadd.f32 0.0, %v660
          %v662 = vpop.f32.mrb[0].mxu0
          %663 = vmatprep.mubr.bf16.mxu0 0
          %664 = vmatmul.mubr.bf16.gmra.mrb[0].mxu0 %v492
          %v665 = vpop.f32.mrb[0].mxu0
          %v666 = vadd.f32 0.0, %v665
          %v667 = vpop.f32.mrb[0].mxu0
          %v668 = vpop.f32.mrb[0].mxu0
          %v669 = vadd.f32 0.0, %v668
          %v670 = vpop.f32.mrb[0].mxu0
          %671 = vdwg.mxu0
          %p672 = scmp.eq.s32.totalorder %s35, 0
          // Predicated region
          $region69: #{tpu_custom_call.1} parent=67 // pred_check
            %p673 = pneg %p672
          $region70: #{tpu_custom_call.1} parent=67 // pred_check_branch
            %675 = sbr.rel (%p673) target = $region72
          $region71: #{tpu_custom_call.1} parent=67 // pred_region
            %676 = vst [vmem:[#allocation4] sm:$0xff] %v610
            %677 = vst [vmem:[#allocation4 + $0x8] sm:$0xff] %v613
            %678 = vst [vmem:[#allocation4 + $0x10] sm:$0xff] %v618
            %679 = vst [vmem:[#allocation4 + $0x18] sm:$0xff] %v621
            %680 = vst [vmem:[#allocation4 + $0x20] sm:$0xff] %v626
            %681 = vst [vmem:[#allocation4 + $0x28] sm:$0xff] %v629
            %682 = vst [vmem:[#allocation4 + $0x30] sm:$0xff] %v634
            %683 = vst [vmem:[#allocation4 + $0x38] sm:$0xff] %v637
            %684 = vst [vmem:[#allocation4 + $0x40] sm:$0xff] %v642
            %685 = vst [vmem:[#allocation4 + $0x48] sm:$0xff] %v645
            %686 = vst [vmem:[#allocation4 + $0x50] sm:$0xff] %v650
            %687 = vst [vmem:[#allocation4 + $0x58] sm:$0xff] %v653
            %688 = vst [vmem:[#allocation4 + $0x60] sm:$0xff] %v658
            %689 = vst [vmem:[#allocation4 + $0x68] sm:$0xff] %v661
            %690 = vst [vmem:[#allocation4 + $0x70] sm:$0xff] %v666
            %691 = vst [vmem:[#allocation4 + $0x78] sm:$0xff] %v669
          $region72: #{tpu_custom_call.1} parent=67 // pred_fallthru
            _
          %p692 = scmp.ne.s32.totalorder %s35, 0
          // Predicated region
          $region73: #{tpu_custom_call.1} parent=67 // pred_check
            %p693 = pneg %p692
          $region74: #{tpu_custom_call.1} parent=67 // pred_check_branch
            %695 = sbr.rel (%p693) target = $region76
          $region75: #{tpu_custom_call.1} parent=67 // pred_region
            %v696 = vld [vmem:[#allocation4] sm:$0xff]
            %v697 = vld [vmem:[#allocation4 + $0x8] sm:$0xff]
            %v698 = vld [vmem:[#allocation4 + $0x10] sm:$0xff]
            %v699 = vld [vmem:[#allocation4 + $0x18] sm:$0xff]
            %v700 = vld [vmem:[#allocation4 + $0x20] sm:$0xff]
            %v701 = vld [vmem:[#allocation4 + $0x28] sm:$0xff]
            %v702 = vld [vmem:[#allocation4 + $0x30] sm:$0xff]
            %v703 = vld [vmem:[#allocation4 + $0x38] sm:$0xff]
            %v704 = vld [vmem:[#allocation4 + $0x40] sm:$0xff]
            %v705 = vld [vmem:[#allocation4 + $0x48] sm:$0xff]
            %v706 = vld [vmem:[#allocation4 + $0x50] sm:$0xff]
            %v707 = vld [vmem:[#allocation4 + $0x58] sm:$0xff]
            %v708 = vld [vmem:[#allocation4 + $0x60] sm:$0xff]
            %v709 = vld [vmem:[#allocation4 + $0x68] sm:$0xff]
            %v710 = vld [vmem:[#allocation4 + $0x70] sm:$0xff]
            %v711 = vld [vmem:[#allocation4 + $0x78] sm:$0xff]
            %v712 = vadd.f32 %v696, %v610
            %v713 = vadd.f32 %v697, %v613
            %v714 = vadd.f32 %v698, %v618
            %v715 = vadd.f32 %v699, %v621
            %v716 = vadd.f32 %v700, %v626
            %v717 = vadd.f32 %v701, %v629
            %v718 = vadd.f32 %v702, %v634
            %v719 = vadd.f32 %v703, %v637
            %v720 = vadd.f32 %v704, %v642
            %v721 = vadd.f32 %v705, %v645
            %v722 = vadd.f32 %v706, %v650
            %v723 = vadd.f32 %v707, %v653
            %v724 = vadd.f32 %v708, %v658
            %v725 = vadd.f32 %v709, %v661
            %v726 = vadd.f32 %v710, %v666
            %v727 = vadd.f32 %v711, %v669
            %728 = vst [vmem:[#allocation4] sm:$0xff] %v712
            %729 = vst [vmem:[#allocation4 + $0x8] sm:$0xff] %v713
            %730 = vst [vmem:[#allocation4 + $0x10] sm:$0xff] %v714
            %731 = vst [vmem:[#allocation4 + $0x18] sm:$0xff] %v715
            %732 = vst [vmem:[#allocation4 + $0x20] sm:$0xff] %v716
            %733 = vst [vmem:[#allocation4 + $0x28] sm:$0xff] %v717
            %734 = vst [vmem:[#allocation4 + $0x30] sm:$0xff] %v718
            %735 = vst [vmem:[#allocation4 + $0x38] sm:$0xff] %v719
            %736 = vst [vmem:[#allocation4 + $0x40] sm:$0xff] %v720
            %737 = vst [vmem:[#allocation4 + $0x48] sm:$0xff] %v721
            %738 = vst [vmem:[#allocation4 + $0x50] sm:$0xff] %v722
            %739 = vst [vmem:[#allocation4 + $0x58] sm:$0xff] %v723
            %740 = vst [vmem:[#allocation4 + $0x60] sm:$0xff] %v724
            %741 = vst [vmem:[#allocation4 + $0x68] sm:$0xff] %v725
            %742 = vst [vmem:[#allocation4 + $0x70] sm:$0xff] %v726
            %743 = vst [vmem:[#allocation4 + $0x78] sm:$0xff] %v727
          $region76: #{tpu_custom_call.1} parent=67 // pred_fallthru
            _
        $region68: #{tpu_custom_call.1} parent=47 // pred_fallthru
          _
        %p744 = scmp.gt.s32.totalorder %s33, 0
        %p745 = pnand %p744, %p505
        %p746 = pneg %p745
        // Predicated region
        $region77: #{tpu_custom_call.1} parent=47 // pred_check
          _
        $region78: #{tpu_custom_call.1} parent=47 // pred_check_branch
          %748 = sbr.rel (%p745) target = $region80
        $region79: #{tpu_custom_call.1} parent=47 // pred_region
          %s749 = sshra.s32 %s506, 4
          %s750 = sand.u32 %s506, 15
          %s751 = smul.addr %s749, 8
          %s752 = scalar_lea.vmem [#allocation2], %s751
          %v753 = vld [vmem:[%s752] sm:$0xff]
          %v754 = vld [vmem:[%s752 + $0x8] sm:$0xff]
          %v755 = vld [vmem:[%s752 + $0x10] sm:$0xff]
          %v756 = vld [vmem:[%s752 + $0x18] sm:$0xff]
          %v757 = vld [vmem:[%s752 + $0x20] sm:$0xff]
          %v758 = vld [vmem:[%s752 + $0x28] sm:$0xff]
          %v759 = vld [vmem:[%s752 + $0x30] sm:$0xff]
          %v760 = vld [vmem:[%s752 + $0x38] sm:$0xff]
          %761 = vmatprep.subr.bf16.mxu0 0
          %762 = vmatpush1.bf16.msra.mxu0 %v753
          %763 = vmatprep.subr.bf16.mxu0 0
          %764 = vmatpush1.bf16.msra.mxu0 %v754
          %765 = vmatprep.subr.bf16.mxu0 0
          %766 = vmatpush1.bf16.msra.mxu0 %v755
          %767 = vmatprep.subr.bf16.mxu0 0
          %768 = vmatpush1.bf16.msra.mxu0 %v756
          %769 = vmatprep.subr.bf16.mxu0 0
          %770 = vmatpush1.bf16.msra.mxu0 %v757
          %771 = vmatprep.subr.bf16.mxu0 0
          %772 = vmatpush1.bf16.msra.mxu0 %v758
          %773 = vmatprep.subr.bf16.mxu0 0
          %774 = vmatpush1.bf16.msra.mxu0 %v759
          %775 = vmatprep.subr.bf16.mxu0 0
          %776 = vmatpush1.bf16.msra.mxu0 %v760
          %777 = vmatprep.subr.bf16.mxu0 0
          %778 = vmatpush1.bf16.msra.mxu0 0
          %779 = vmatprep.subr.bf16.mxu0 0
          %780 = vmatpush1.bf16.msra.mxu0 0
          %781 = vmatprep.subr.bf16.mxu0 0
          %782 = vmatpush1.bf16.msra.mxu0 0
          %783 = vmatprep.subr.bf16.mxu0 0
          %784 = vmatpush1.bf16.msra.mxu0 0
          %785 = vmatprep.subr.bf16.mxu0 0
          %786 = vmatpush1.bf16.msra.mxu0 0
          %787 = vmatprep.subr.bf16.mxu0 0
          %788 = vmatpush1.bf16.msra.mxu0 0
          %789 = vmatprep.subr.bf16.mxu0 0
          %790 = vmatpush1.bf16.msra.mxu0 0
          %791 = vmatprep.subr.bf16.mxu0 0
          %792 = vmatpush1.bf16.msra.mxu0 0
          %793 = vmatprep.mubr.bf16.mxu0 0
          %794 = vmatmul.mubr.bf16.gmra.mrb[0].mxu0 %v485
          %v795 = vpop.f32.mrb[0].mxu0
          %v796 = vadd.f32 0.0, %v795
          %v797 = vpop.f32.mrb[0].mxu0
          %v798 = vpop.f32.mrb[0].mxu0
          %v799 = vadd.f32 0.0, %v798
          %v800 = vpop.f32.mrb[0].mxu0
          %801 = vmatprep.mubr.bf16.mxu0 0
          %802 = vmatmul.mubr.bf16.gmra.mrb[0].mxu0 %v486
          %v803 = vpop.f32.mrb[0].mxu0
          %v804 = vadd.f32 0.0, %v803
          %v805 = vpop.f32.mrb[0].mxu0
          %v806 = vpop.f32.mrb[0].mxu0
          %v807 = vadd.f32 0.0, %v806
          %v808 = vpop.f32.mrb[0].mxu0
          %809 = vmatprep.mubr.bf16.mxu0 0
          %810 = vmatmul.mubr.bf16.gmra.mrb[0].mxu0 %v487
          %v811 = vpop.f32.mrb[0].mxu0
          %v812 = vadd.f32 0.0, %v811
          %v813 = vpop.f32.mrb[0].mxu0
          %v814 = vpop.f32.mrb[0].mxu0
          %v815 = vadd.f32 0.0, %v814
          %v816 = vpop.f32.mrb[0].mxu0
          %817 = vmatprep.mubr.bf16.mxu0 0
          %818 = vmatmul.mubr.bf16.gmra.mrb[0].mxu0 %v488
          %v819 = vpop.f32.mrb[0].mxu0
          %v820 = vadd.f32 0.0, %v819
          %v821 = vpop.f32.mrb[0].mxu0
          %v822 = vpop.f32.mrb[0].mxu0
          %v823 = vadd.f32 0.0, %v822
          %v824 = vpop.f32.mrb[0].mxu0
          %825 = vmatprep.mubr.bf16.mxu0 0
          %826 = vmatmul.mubr.bf16.gmra.mrb[0].mxu0 %v489
          %v827 = vpop.f32.mrb[0].mxu0
          %v828 = vadd.f32 0.0, %v827
          %v829 = vpop.f32.mrb[0].mxu0
          %v830 = vpop.f32.mrb[0].mxu0
          %v831 = vadd.f32 0.0, %v830
          %v832 = vpop.f32.mrb[0].mxu0
          %833 = vmatprep.mubr.bf16.mxu0 0
          %834 = vmatmul.mubr.bf16.gmra.mrb[0].mxu0 %v490
          %v835 = vpop.f32.mrb[0].mxu0
          %v836 = vadd.f32 0.0, %v835
          %v837 = vpop.f32.mrb[0].mxu0
          %v838 = vpop.f32.mrb[0].mxu0
          %v839 = vadd.f32 0.0, %v838
          %v840 = vpop.f32.mrb[0].mxu0
          %841 = vmatprep.mubr.bf16.mxu0 0
          %842 = vmatmul.mubr.bf16.gmra.mrb[0].mxu0 %v491
          %v843 = vpop.f32.mrb[0].mxu0
          %v844 = vadd.f32 0.0, %v843
          %v845 = vpop.f32.mrb[0].mxu0
          %v846 = vpop.f32.mrb[0].mxu0
          %v847 = vadd.f32 0.0, %v846
          %v848 = vpop.f32.mrb[0].mxu0
          %849 = vmatprep.mubr.bf16.mxu0 0
          %850 = vmatmul.mubr.bf16.gmra.mrb[0].mxu0 %v492
          %v851 = vpop.f32.mrb[0].mxu0
          %v852 = vadd.f32 0.0, %v851
          %v853 = vpop.f32.mrb[0].mxu0
          %v854 = vpop.f32.mrb[0].mxu0
          %v855 = vadd.f32 0.0, %v854
          %v856 = vpop.f32.mrb[0].mxu0
          %857 = vdwg.mxu0
          %p858 = scmp.eq.s32.totalorder %s35, 0
          // Predicated region
          $region81: #{tpu_custom_call.1} parent=79 // pred_check
            %p859 = pneg %p858
          $region82: #{tpu_custom_call.1} parent=79 // pred_check_branch
            %861 = sbr.rel (%p859) target = $region84
          $region83: #{tpu_custom_call.1} parent=79 // pred_region
            %862 = vst [vmem:[#allocation4] sm:$0xff] %v796
            %863 = vst [vmem:[#allocation4 + $0x8] sm:$0xff] %v799
            %864 = vst [vmem:[#allocation4 + $0x10] sm:$0xff] %v804
            %865 = vst [vmem:[#allocation4 + $0x18] sm:$0xff] %v807
            %866 = vst [vmem:[#allocation4 + $0x20] sm:$0xff] %v812
            %867 = vst [vmem:[#allocation4 + $0x28] sm:$0xff] %v815
            %868 = vst [vmem:[#allocation4 + $0x30] sm:$0xff] %v820
            %869 = vst [vmem:[#allocation4 + $0x38] sm:$0xff] %v823
            %870 = vst [vmem:[#allocation4 + $0x40] sm:$0xff] %v828
            %871 = vst [vmem:[#allocation4 + $0x48] sm:$0xff] %v831
            %872 = vst [vmem:[#allocation4 + $0x50] sm:$0xff] %v836
            %873 = vst [vmem:[#allocation4 + $0x58] sm:$0xff] %v839
            %874 = vst [vmem:[#allocation4 + $0x60] sm:$0xff] %v844
            %875 = vst [vmem:[#allocation4 + $0x68] sm:$0xff] %v847
            %876 = vst [vmem:[#allocation4 + $0x70] sm:$0xff] %v852
            %877 = vst [vmem:[#allocation4 + $0x78] sm:$0xff] %v855
          $region84: #{tpu_custom_call.1} parent=79 // pred_fallthru
            _
          %p878 = scmp.ne.s32.totalorder %s35, 0
          // Predicated region
          $region85: #{tpu_custom_call.1} parent=79 // pred_check
            %p879 = pneg %p878
          $region86: #{tpu_custom_call.1} parent=79 // pred_check_branch
            %881 = sbr.rel (%p879) target = $region88
          $region87: #{tpu_custom_call.1} parent=79 // pred_region
            %v882 = vld [vmem:[#allocation4] sm:$0xff]
            %v883 = vld [vmem:[#allocation4 + $0x8] sm:$0xff]
            %v884 = vld [vmem:[#allocation4 + $0x10] sm:$0xff]
            %v885 = vld [vmem:[#allocation4 + $0x18] sm:$0xff]
            %v886 = vld [vmem:[#allocation4 + $0x20] sm:$0xff]
            %v887 = vld [vmem:[#allocation4 + $0x28] sm:$0xff]
            %v888 = vld [vmem:[#allocation4 + $0x30] sm:$0xff]
            %v889 = vld [vmem:[#allocation4 + $0x38] sm:$0xff]
            %v890 = vld [vmem:[#allocation4 + $0x40] sm:$0xff]
            %v891 = vld [vmem:[#allocation4 + $0x48] sm:$0xff]
            %v892 = vld [vmem:[#allocation4 + $0x50] sm:$0xff]
            %v893 = vld [vmem:[#allocation4 + $0x58] sm:$0xff]
            %v894 = vld [vmem:[#allocation4 + $0x60] sm:$0xff]
            %v895 = vld [vmem:[#allocation4 + $0x68] sm:$0xff]
            %v896 = vld [vmem:[#allocation4 + $0x70] sm:$0xff]
            %v897 = vld [vmem:[#allocation4 + $0x78] sm:$0xff]
            %v898 = vadd.f32 %v882, %v796
            %v899 = vadd.f32 %v883, %v799
            %v900 = vadd.f32 %v884, %v804
            %v901 = vadd.f32 %v885, %v807
            %v902 = vadd.f32 %v886, %v812
            %v903 = vadd.f32 %v887, %v815
            %v904 = vadd.f32 %v888, %v820
            %v905 = vadd.f32 %v889, %v823
            %v906 = vadd.f32 %v890, %v828
            %v907 = vadd.f32 %v891, %v831
            %v908 = vadd.f32 %v892, %v836
            %v909 = vadd.f32 %v893, %v839
            %v910 = vadd.f32 %v894, %v844
            %v911 = vadd.f32 %v895, %v847
            %v912 = vadd.f32 %v896, %v852
            %v913 = vadd.f32 %v897, %v855
            %914 = vst [vmem:[#allocation4] sm:$0xff] %v898
            %915 = vst [vmem:[#allocation4 + $0x8] sm:$0xff] %v899
            %916 = vst [vmem:[#allocation4 + $0x10] sm:$0xff] %v900
            %917 = vst [vmem:[#allocation4 + $0x18] sm:$0xff] %v901
            %918 = vst [vmem:[#allocation4 + $0x20] sm:$0xff] %v902
            %919 = vst [vmem:[#allocation4 + $0x28] sm:$0xff] %v903
            %920 = vst [vmem:[#allocation4 + $0x30] sm:$0xff] %v904
            %921 = vst [vmem:[#allocation4 + $0x38] sm:$0xff] %v905
            %922 = vst [vmem:[#allocation4 + $0x40] sm:$0xff] %v906
            %923 = vst [vmem:[#allocation4 + $0x48] sm:$0xff] %v907
            %924 = vst [vmem:[#allocation4 + $0x50] sm:$0xff] %v908
            %925 = vst [vmem:[#allocation4 + $0x58] sm:$0xff] %v909
            %926 = vst [vmem:[#allocation4 + $0x60] sm:$0xff] %v910
            %927 = vst [vmem:[#allocation4 + $0x68] sm:$0xff] %v911
            %928 = vst [vmem:[#allocation4 + $0x70] sm:$0xff] %v912
            %929 = vst [vmem:[#allocation4 + $0x78] sm:$0xff] %v913
          $region88: #{tpu_custom_call.1} parent=79 // pred_fallthru
            _
        $region80: #{tpu_custom_call.1} parent=47 // pred_fallthru
          _
        %p930 = scmp.ne.s32.totalorder %s504, 0
        %p931 = pnand %p744, %p930
        %p932 = pneg %p931
        // Predicated region
        $region89: #{tpu_custom_call.1} parent=47 // pred_check
          _
        $region90: #{tpu_custom_call.1} parent=47 // pred_check_branch
          %934 = sbr.rel (%p931) target = $region92
        $region91: #{tpu_custom_call.1} parent=47 // pred_region
          %s935 = sshra.s32 %s506, 4
          %s936 = sand.u32 %s506, 15
          %s937 = smul.addr %s935, 8
          %s938 = scalar_lea.vmem [#allocation3], %s937
          %v939 = vld [vmem:[%s938] sm:$0xff]
          %v940 = vld [vmem:[%s938 + $0x8] sm:$0xff]
          %v941 = vld [vmem:[%s938 + $0x10] sm:$0xff]
          %v942 = vld [vmem:[%s938 + $0x18] sm:$0xff]
          %v943 = vld [vmem:[%s938 + $0x20] sm:$0xff]
          %v944 = vld [vmem:[%s938 + $0x28] sm:$0xff]
          %v945 = vld [vmem:[%s938 + $0x30] sm:$0xff]
          %v946 = vld [vmem:[%s938 + $0x38] sm:$0xff]
          %947 = vmatprep.subr.bf16.mxu0 0
          %948 = vmatpush1.bf16.msra.mxu0 %v939
          %949 = vmatprep.subr.bf16.mxu0 0
          %950 = vmatpush1.bf16.msra.mxu0 %v940
          %951 = vmatprep.subr.bf16.mxu0 0
          %952 = vmatpush1.bf16.msra.mxu0 %v941
          %953 = vmatprep.subr.bf16.mxu0 0
          %954 = vmatpush1.bf16.msra.mxu0 %v942
          %955 = vmatprep.subr.bf16.mxu0 0
          %956 = vmatpush1.bf16.msra.mxu0 %v943
          %957 = vmatprep.subr.bf16.mxu0 0
          %958 = vmatpush1.bf16.msra.mxu0 %v944
          %959 = vmatprep.subr.bf16.mxu0 0
          %960 = vmatpush1.bf16.msra.mxu0 %v945
          %961 = vmatprep.subr.bf16.mxu0 0
          %962 = vmatpush1.bf16.msra.mxu0 %v946
          %963 = vmatprep.subr.bf16.mxu0 0
          %964 = vmatpush1.bf16.msra.mxu0 0
          %965 = vmatprep.subr.bf16.mxu0 0
          %966 = vmatpush1.bf16.msra.mxu0 0
          %967 = vmatprep.subr.bf16.mxu0 0
          %968 = vmatpush1.bf16.msra.mxu0 0
          %969 = vmatprep.subr.bf16.mxu0 0
          %970 = vmatpush1.bf16.msra.mxu0 0
          %971 = vmatprep.subr.bf16.mxu0 0
          %972 = vmatpush1.bf16.msra.mxu0 0
          %973 = vmatprep.subr.bf16.mxu0 0
          %974 = vmatpush1.bf16.msra.mxu0 0
          %975 = vmatprep.subr.bf16.mxu0 0
          %976 = vmatpush1.bf16.msra.mxu0 0
          %977 = vmatprep.subr.bf16.mxu0 0
          %978 = vmatpush1.bf16.msra.mxu0 0
          %979 = vmatprep.mubr.bf16.mxu0 0
          %980 = vmatmul.mubr.bf16.gmra.mrb[0].mxu0 %v485
          %v981 = vpop.f32.mrb[0].mxu0
          %v982 = vadd.f32 0.0, %v981
          %v983 = vpop.f32.mrb[0].mxu0
          %v984 = vpop.f32.mrb[0].mxu0
          %v985 = vadd.f32 0.0, %v984
          %v986 = vpop.f32.mrb[0].mxu0
          %987 = vmatprep.mubr.bf16.mxu0 0
          %988 = vmatmul.mubr.bf16.gmra.mrb[0].mxu0 %v486
          %v989 = vpop.f32.mrb[0].mxu0
          %v990 = vadd.f32 0.0, %v989
          %v991 = vpop.f32.mrb[0].mxu0
          %v992 = vpop.f32.mrb[0].mxu0
          %v993 = vadd.f32 0.0, %v992
          %v994 = vpop.f32.mrb[0].mxu0
          %995 = vmatprep.mubr.bf16.mxu0 0
          %996 = vmatmul.mubr.bf16.gmra.mrb[0].mxu0 %v487
          %v997 = vpop.f32.mrb[0].mxu0
          %v998 = vadd.f32 0.0, %v997
          %v999 = vpop.f32.mrb[0].mxu0
          %v1000 = vpop.f32.mrb[0].mxu0
          %v1001 = vadd.f32 0.0, %v1000
          %v1002 = vpop.f32.mrb[0].mxu0
          %1003 = vmatprep.mubr.bf16.mxu0 0
          %1004 = vmatmul.mubr.bf16.gmra.mrb[0].mxu0 %v488
          %v1005 = vpop.f32.mrb[0].mxu0
          %v1006 = vadd.f32 0.0, %v1005
          %v1007 = vpop.f32.mrb[0].mxu0
          %v1008 = vpop.f32.mrb[0].mxu0
          %v1009 = vadd.f32 0.0, %v1008
          %v1010 = vpop.f32.mrb[0].mxu0
          %1011 = vmatprep.mubr.bf16.mxu0 0
          %1012 = vmatmul.mubr.bf16.gmra.mrb[0].mxu0 %v489
          %v1013 = vpop.f32.mrb[0].mxu0
          %v1014 = vadd.f32 0.0, %v1013
          %v1015 = vpop.f32.mrb[0].mxu0
          %v1016 = vpop.f32.mrb[0].mxu0
          %v1017 = vadd.f32 0.0, %v1016
          %v1018 = vpop.f32.mrb[0].mxu0
          %1019 = vmatprep.mubr.bf16.mxu0 0
          %1020 = vmatmul.mubr.bf16.gmra.mrb[0].mxu0 %v490
          %v1021 = vpop.f32.mrb[0].mxu0
          %v1022 = vadd.f32 0.0, %v1021
          %v1023 = vpop.f32.mrb[0].mxu0
          %v1024 = vpop.f32.mrb[0].mxu0
          %v1025 = vadd.f32 0.0, %v1024
          %v1026 = vpop.f32.mrb[0].mxu0
          %1027 = vmatprep.mubr.bf16.mxu0 0
          %1028 = vmatmul.mubr.bf16.gmra.mrb[0].mxu0 %v491
          %v1029 = vpop.f32.mrb[0].mxu0
          %v1030 = vadd.f32 0.0, %v1029
          %v1031 = vpop.f32.mrb[0].mxu0
          %v1032 = vpop.f32.mrb[0].mxu0
          %v1033 = vadd.f32 0.0, %v1032
          %v1034 = vpop.f32.mrb[0].mxu0
          %1035 = vmatprep.mubr.bf16.mxu0 0
          %1036 = vmatmul.mubr.bf16.gmra.mrb[0].mxu0 %v492
          %v1037 = vpop.f32.mrb[0].mxu0
          %v1038 = vadd.f32 0.0, %v1037
          %v1039 = vpop.f32.mrb[0].mxu0
          %v1040 = vpop.f32.mrb[0].mxu0
          %v1041 = vadd.f32 0.0, %v1040
          %v1042 = vpop.f32.mrb[0].mxu0
          %1043 = vdwg.mxu0
          %p1044 = scmp.eq.s32.totalorder %s35, 0
          // Predicated region
          $region93: #{tpu_custom_call.1} parent=91 // pred_check
            %p1045 = pneg %p1044
          $region94: #{tpu_custom_call.1} parent=91 // pred_check_branch
            %1047 = sbr.rel (%p1045) target = $region96
          $region95: #{tpu_custom_call.1} parent=91 // pred_region
            %1048 = vst [vmem:[#allocation4] sm:$0xff] %v982
            %1049 = vst [vmem:[#allocation4 + $0x8] sm:$0xff] %v985
            %1050 = vst [vmem:[#allocation4 + $0x10] sm:$0xff] %v990
            %1051 = vst [vmem:[#allocation4 + $0x18] sm:$0xff] %v993
            %1052 = vst [vmem:[#allocation4 + $0x20] sm:$0xff] %v998
            %1053 = vst [vmem:[#allocation4 + $0x28] sm:$0xff] %v1001
            %1054 = vst [vmem:[#allocation4 + $0x30] sm:$0xff] %v1006
            %1055 = vst [vmem:[#allocation4 + $0x38] sm:$0xff] %v1009
            %1056 = vst [vmem:[#allocation4 + $0x40] sm:$0xff] %v1014
            %1057 = vst [vmem:[#allocation4 + $0x48] sm:$0xff] %v1017
            %1058 = vst [vmem:[#allocation4 + $0x50] sm:$0xff] %v1022
            %1059 = vst [vmem:[#allocation4 + $0x58] sm:$0xff] %v1025
            %1060 = vst [vmem:[#allocation4 + $0x60] sm:$0xff] %v1030
            %1061 = vst [vmem:[#allocation4 + $0x68] sm:$0xff] %v1033
            %1062 = vst [vmem:[#allocation4 + $0x70] sm:$0xff] %v1038
            %1063 = vst [vmem:[#allocation4 + $0x78] sm:$0xff] %v1041
          $region96: #{tpu_custom_call.1} parent=91 // pred_fallthru
            _
          %p1064 = scmp.ne.s32.totalorder %s35, 0
          // Predicated region
          $region97: #{tpu_custom_call.1} parent=91 // pred_check
            %p1065 = pneg %p1064
          $region98: #{tpu_custom_call.1} parent=91 // pred_check_branch
            %1067 = sbr.rel (%p1065) target = $region100
          $region99: #{tpu_custom_call.1} parent=91 // pred_region
            %v1068 = vld [vmem:[#allocation4] sm:$0xff]
            %v1069 = vld [vmem:[#allocation4 + $0x8] sm:$0xff]
            %v1070 = vld [vmem:[#allocation4 + $0x10] sm:$0xff]
            %v1071 = vld [vmem:[#allocation4 + $0x18] sm:$0xff]
            %v1072 = vld [vmem:[#allocation4 + $0x20] sm:$0xff]
            %v1073 = vld [vmem:[#allocation4 + $0x28] sm:$0xff]
            %v1074 = vld [vmem:[#allocation4 + $0x30] sm:$0xff]
            %v1075 = vld [vmem:[#allocation4 + $0x38] sm:$0xff]
            %v1076 = vld [vmem:[#allocation4 + $0x40] sm:$0xff]
            %v1077 = vld [vmem:[#allocation4 + $0x48] sm:$0xff]
            %v1078 = vld [vmem:[#allocation4 + $0x50] sm:$0xff]
            %v1079 = vld [vmem:[#allocation4 + $0x58] sm:$0xff]
            %v1080 = vld [vmem:[#allocation4 + $0x60] sm:$0xff]
            %v1081 = vld [vmem:[#allocation4 + $0x68] sm:$0xff]
            %v1082 = vld [vmem:[#allocation4 + $0x70] sm:$0xff]
            %v1083 = vld [vmem:[#allocation4 + $0x78] sm:$0xff]
            %v1084 = vadd.f32 %v1068, %v982
            %v1085 = vadd.f32 %v1069, %v985
            %v1086 = vadd.f32 %v1070, %v990
            %v1087 = vadd.f32 %v1071, %v993
            %v1088 = vadd.f32 %v1072, %v998
            %v1089 = vadd.f32 %v1073, %v1001
            %v1090 = vadd.f32 %v1074, %v1006
            %v1091 = vadd.f32 %v1075, %v1009
            %v1092 = vadd.f32 %v1076, %v1014
            %v1093 = vadd.f32 %v1077, %v1017
            %v1094 = vadd.f32 %v1078, %v1022
            %v1095 = vadd.f32 %v1079, %v1025
            %v1096 = vadd.f32 %v1080, %v1030
            %v1097 = vadd.f32 %v1081, %v1033
            %v1098 = vadd.f32 %v1082, %v1038
            %v1099 = vadd.f32 %v1083, %v1041
            %1100 = vst [vmem:[#allocation4] sm:$0xff] %v1084
            %1101 = vst [vmem:[#allocation4 + $0x8] sm:$0xff] %v1085
            %1102 = vst [vmem:[#allocation4 + $0x10] sm:$0xff] %v1086
            %1103 = vst [vmem:[#allocation4 + $0x18] sm:$0xff] %v1087
            %1104 = vst [vmem:[#allocation4 + $0x20] sm:$0xff] %v1088
            %1105 = vst [vmem:[#allocation4 + $0x28] sm:$0xff] %v1089
            %1106 = vst [vmem:[#allocation4 + $0x30] sm:$0xff] %v1090
            %1107 = vst [vmem:[#allocation4 + $0x38] sm:$0xff] %v1091
            %1108 = vst [vmem:[#allocation4 + $0x40] sm:$0xff] %v1092
            %1109 = vst [vmem:[#allocation4 + $0x48] sm:$0xff] %v1093
            %1110 = vst [vmem:[#allocation4 + $0x50] sm:$0xff] %v1094
            %1111 = vst [vmem:[#allocation4 + $0x58] sm:$0xff] %v1095
            %1112 = vst [vmem:[#allocation4 + $0x60] sm:$0xff] %v1096
            %1113 = vst [vmem:[#allocation4 + $0x68] sm:$0xff] %v1097
            %1114 = vst [vmem:[#allocation4 + $0x70] sm:$0xff] %v1098
            %1115 = vst [vmem:[#allocation4 + $0x78] sm:$0xff] %v1099
          $region100: #{tpu_custom_call.1} parent=91 // pred_fallthru
            _
        $region92: #{tpu_custom_call.1} parent=47 // pred_fallthru
          _
        %p1116 = scmp.eq.s32.totalorder %s35, 1
        // Predicated region
        $region101: #{tpu_custom_call.1} parent=47 // pred_check
          %p1117 = pneg %p1116
        $region102: #{tpu_custom_call.1} parent=47 // pred_check_branch
          %1119 = sbr.rel (%p1117) target = $region104
        $region103: #{tpu_custom_call.1} parent=47 // pred_region
          %v1120 = vld [vmem:[#allocation4] sm:$0xff]
          %v1121 = vld [vmem:[#allocation4 + $0x8] sm:$0xff]
          %v1122 = vld [vmem:[#allocation4 + $0x10] sm:$0xff]
          %v1123 = vld [vmem:[#allocation4 + $0x18] sm:$0xff]
          %v1124 = vld [vmem:[#allocation4 + $0x20] sm:$0xff]
          %v1125 = vld [vmem:[#allocation4 + $0x28] sm:$0xff]
          %v1126 = vld [vmem:[#allocation4 + $0x30] sm:$0xff]
          %v1127 = vld [vmem:[#allocation4 + $0x38] sm:$0xff]
          %v1128 = vld [vmem:[#allocation4 + $0x40] sm:$0xff]
          %v1129 = vld [vmem:[#allocation4 + $0x48] sm:$0xff]
          %v1130 = vld [vmem:[#allocation4 + $0x50] sm:$0xff]
          %v1131 = vld [vmem:[#allocation4 + $0x58] sm:$0xff]
          %v1132 = vld [vmem:[#allocation4 + $0x60] sm:$0xff]
          %v1133 = vld [vmem:[#allocation4 + $0x68] sm:$0xff]
          %v1134 = vld [vmem:[#allocation4 + $0x70] sm:$0xff]
          %v1135 = vld [vmem:[#allocation4 + $0x78] sm:$0xff]
          %v1136 = vpack.c.bf16 %v1121, %v1120
          %v1137 = vpack.c.bf16 %v1123, %v1122
          %v1138 = vpack.c.bf16 %v1125, %v1124
          %v1139 = vpack.c.bf16 %v1127, %v1126
          %v1140 = vpack.c.bf16 %v1129, %v1128
          %v1141 = vpack.c.bf16 %v1131, %v1130
          %v1142 = vpack.c.bf16 %v1133, %v1132
          %v1143 = vpack.c.bf16 %v1135, %v1134
          %v1144 = vld [vmem:[%s406] sm:$0xf]
          %v1145 = vld [vmem:[%s406 + $0x4] sm:$0xf]
          %v1146 = vld [vmem:[%s406 + $0x8] sm:$0xf]
          %v1147 = vld [vmem:[%s406 + $0xc] sm:$0xf]
          %v1148 = vld [vmem:[%s406 + $0x10] sm:$0xf]
          %v1149 = vld [vmem:[%s406 + $0x14] sm:$0xf]
          %v1150 = vld [vmem:[%s406 + $0x18] sm:$0xf]
          %v1151 = vld [vmem:[%s406 + $0x1c] sm:$0xf]
          %v1152 = vld [vmem:[%s406 + $0x20] sm:$0xf]
          %v1153 = vld [vmem:[%s406 + $0x24] sm:$0xf]
          %v1154 = vld [vmem:[%s406 + $0x28] sm:$0xf]
          %v1155 = vld [vmem:[%s406 + $0x2c] sm:$0xf]
          %v1156 = vld [vmem:[%s406 + $0x30] sm:$0xf]
          %v1157 = vld [vmem:[%s406 + $0x34] sm:$0xf]
          %v1158 = vld [vmem:[%s406 + $0x38] sm:$0xf]
          %v1159 = vld [vmem:[%s406 + $0x3c] sm:$0xf]
          %v1160 = vld [vmem:[%s472] sm:$0x1]
          %v1162 = vlaneseq
          %v1163 = vshrl.u32 %v1162, 7
          %v1164 = vsub.s32 0, %v1163
          %v1165 = vrot.slane %v1160, %v1164
          %v1183 = vunpack.c.l.b16 %v1144
          %v1184 = vunpack.c.l.b16 %v1145
          %v1185 = vunpack.c.l.b16 %v1146
          %v1186 = vunpack.c.l.b16 %v1147
          %v1187 = vunpack.c.l.b16 %v1148
          %v1188 = vunpack.c.l.b16 %v1149
          %v1189 = vunpack.c.l.b16 %v1150
          %v1190 = vunpack.c.l.b16 %v1151
          %v1191 = vunpack.c.l.b16 %v1152
          %v1192 = vunpack.c.l.b16 %v1153
          %v1193 = vunpack.c.l.b16 %v1154
          %v1194 = vunpack.c.l.b16 %v1155
          %v1195 = vunpack.c.l.b16 %v1156
          %v1196 = vunpack.c.l.b16 %v1157
          %v1197 = vunpack.c.l.b16 %v1158
          %v1198 = vunpack.c.l.b16 %v1159
          %v1199 = vpack.c.b16 %v1184, %v1183
          %v1200 = vpack.c.b16 %v1186, %v1185
          %v1201 = vpack.c.b16 %v1188, %v1187
          %v1202 = vpack.c.b16 %v1190, %v1189
          %v1203 = vpack.c.b16 %v1192, %v1191
          %v1204 = vpack.c.b16 %v1194, %v1193
          %v1205 = vpack.c.b16 %v1196, %v1195
          %v1206 = vpack.c.b16 %v1198, %v1197
          %1215 = vmatprep.subr.bf16.mxu0 0
          %1216 = vmatpush1.bf16.msra.mxu0 %v1199
          %1217 = vmatprep.subr.bf16.mxu0 0
          %1218 = vmatpush1.bf16.msra.mxu0 %v1200
          %1219 = vmatprep.subr.bf16.mxu0 0
          %1220 = vmatpush1.bf16.msra.mxu0 %v1201
          %1221 = vmatprep.subr.bf16.mxu0 0
          %1222 = vmatpush1.bf16.msra.mxu0 %v1202
          %1223 = vmatprep.subr.bf16.mxu0 0
          %1224 = vmatpush1.bf16.msra.mxu0 %v1203
          %1225 = vmatprep.subr.bf16.mxu0 0
          %1226 = vmatpush1.bf16.msra.mxu0 %v1204
          %1227 = vmatprep.subr.bf16.mxu0 0
          %1228 = vmatpush1.bf16.msra.mxu0 %v1205
          %1229 = vmatprep.subr.bf16.mxu0 0
          %1230 = vmatpush1.bf16.msra.mxu0 %v1206
          %1231 = vmatprep.subr.bf16.mxu0 0
          %1232 = vmatpush1.bf16.msra.mxu0 0
          %1233 = vmatprep.subr.bf16.mxu0 0
          %1234 = vmatpush1.bf16.msra.mxu0 0
          %1235 = vmatprep.subr.bf16.mxu0 0
          %1236 = vmatpush1.bf16.msra.mxu0 0
          %1237 = vmatprep.subr.bf16.mxu0 0
          %1238 = vmatpush1.bf16.msra.mxu0 0
          %1239 = vmatprep.subr.bf16.mxu0 0
          %1240 = vmatpush1.bf16.msra.mxu0 0
          %1241 = vmatprep.subr.bf16.mxu0 0
          %1242 = vmatpush1.bf16.msra.mxu0 0
          %1243 = vmatprep.subr.bf16.mxu0 0
          %1244 = vmatpush1.bf16.msra.mxu0 0
          %1245 = vmatprep.subr.bf16.mxu0 0
          %1246 = vmatpush1.bf16.msra.mxu0 0
          %1247 = vmatprep.mubr.bf16.mxu0 0
          %1248 = vmatmul.mubr.bf16.gmra.mrb[0].mxu0 %v1136
          %v1249 = vpop.f32.mrb[0].mxu0
          %v1250 = vadd.f32 %v1165, %v1249
          %v1251 = vpop.f32.mrb[0].mxu0
          %v1252 = vpop.f32.mrb[0].mxu0
          %v1253 = vadd.f32 %v1165, %v1252
          %v1254 = vpop.f32.mrb[0].mxu0
          %1255 = vmatprep.mubr.bf16.mxu0 0
          %1256 = vmatmul.mubr.bf16.gmra.mrb[0].mxu0 %v1137
          %v1257 = vpop.f32.mrb[0].mxu0
          %v1258 = vadd.f32 %v1165, %v1257
          %v1259 = vpop.f32.mrb[0].mxu0
          %v1260 = vpop.f32.mrb[0].mxu0
          %v1261 = vadd.f32 %v1165, %v1260
          %v1262 = vpop.f32.mrb[0].mxu0
          %1263 = vmatprep.mubr.bf16.mxu0 0
          %1264 = vmatmul.mubr.bf16.gmra.mrb[0].mxu0 %v1138
          %v1265 = vpop.f32.mrb[0].mxu0
          %v1266 = vadd.f32 %v1165, %v1265
          %v1267 = vpop.f32.mrb[0].mxu0
          %v1268 = vpop.f32.mrb[0].mxu0
          %v1269 = vadd.f32 %v1165, %v1268
          %v1270 = vpop.f32.mrb[0].mxu0
          %1271 = vmatprep.mubr.bf16.mxu0 0
          %1272 = vmatmul.mubr.bf16.gmra.mrb[0].mxu0 %v1139
          %v1273 = vpop.f32.mrb[0].mxu0
          %v1274 = vadd.f32 %v1165, %v1273
          %v1275 = vpop.f32.mrb[0].mxu0
          %v1276 = vpop.f32.mrb[0].mxu0
          %v1277 = vadd.f32 %v1165, %v1276
          %v1278 = vpop.f32.mrb[0].mxu0
          %1279 = vmatprep.mubr.bf16.mxu0 0
          %1280 = vmatmul.mubr.bf16.gmra.mrb[0].mxu0 %v1140
          %v1281 = vpop.f32.mrb[0].mxu0
          %v1282 = vadd.f32 %v1165, %v1281
          %v1283 = vpop.f32.mrb[0].mxu0
          %v1284 = vpop.f32.mrb[0].mxu0
          %v1285 = vadd.f32 %v1165, %v1284
          %v1286 = vpop.f32.mrb[0].mxu0
          %1287 = vmatprep.mubr.bf16.mxu0 0
          %1288 = vmatmul.mubr.bf16.gmra.mrb[0].mxu0 %v1141
          %v1289 = vpop.f32.mrb[0].mxu0
          %v1290 = vadd.f32 %v1165, %v1289
          %v1291 = vpop.f32.mrb[0].mxu0
          %v1292 = vpop.f32.mrb[0].mxu0
          %v1293 = vadd.f32 %v1165, %v1292
          %v1294 = vpop.f32.mrb[0].mxu0
          %1295 = vmatprep.mubr.bf16.mxu0 0
          %1296 = vmatmul.mubr.bf16.gmra.mrb[0].mxu0 %v1142
          %v1297 = vpop.f32.mrb[0].mxu0
          %v1298 = vadd.f32 %v1165, %v1297
          %v1299 = vpop.f32.mrb[0].mxu0
          %v1300 = vpop.f32.mrb[0].mxu0
          %v1301 = vadd.f32 %v1165, %v1300
          %v1302 = vpop.f32.mrb[0].mxu0
          %1303 = vmatprep.mubr.bf16.mxu0 0
          %1304 = vmatmul.mubr.bf16.gmra.mrb[0].mxu0 %v1143
          %v1305 = vpop.f32.mrb[0].mxu0
          %v1306 = vadd.f32 %v1165, %v1305
          %v1307 = vpop.f32.mrb[0].mxu0
          %v1308 = vpop.f32.mrb[0].mxu0
          %v1309 = vadd.f32 %v1165, %v1308
          %v1310 = vpop.f32.mrb[0].mxu0
          %1311 = vdwg.mxu0
          %v1312 = vmax.f32 %v1250, 0.0
          %v1313 = vmax.f32 %v1253, 0.0
          %v1314 = vmax.f32 %v1258, 0.0
          %v1315 = vmax.f32 %v1261, 0.0
          %v1316 = vmax.f32 %v1266, 0.0
          %v1317 = vmax.f32 %v1269, 0.0
          %v1318 = vmax.f32 %v1274, 0.0
          %v1319 = vmax.f32 %v1277, 0.0
          %v1320 = vmax.f32 %v1282, 0.0
          %v1321 = vmax.f32 %v1285, 0.0
          %v1322 = vmax.f32 %v1290, 0.0
          %v1323 = vmax.f32 %v1293, 0.0
          %v1324 = vmax.f32 %v1298, 0.0
          %v1325 = vmax.f32 %v1301, 0.0
          %v1326 = vmax.f32 %v1306, 0.0
          %v1327 = vmax.f32 %v1309, 0.0
          %v1328 = vpack.c.bf16 %v1313, %v1312
          %v1329 = vpack.c.bf16 %v1315, %v1314
          %v1330 = vpack.c.bf16 %v1317, %v1316
          %v1331 = vpack.c.bf16 %v1319, %v1318
          %v1332 = vpack.c.bf16 %v1321, %v1320
          %v1333 = vpack.c.bf16 %v1323, %v1322
          %v1334 = vpack.c.bf16 %v1325, %v1324
          %v1335 = vpack.c.bf16 %v1327, %v1326
          %v1336 = vld [vmem:[%s415] sm:$0xf]
          %v1337 = vld [vmem:[%s415 + $0x4] sm:$0xf]
          %v1338 = vld [vmem:[%s415 + $0x8] sm:$0xf]
          %v1339 = vld [vmem:[%s415 + $0xc] sm:$0xf]
          %v1340 = vld [vmem:[%s415 + $0x10] sm:$0xf]
          %v1341 = vld [vmem:[%s415 + $0x14] sm:$0xf]
          %v1342 = vld [vmem:[%s415 + $0x18] sm:$0xf]
          %v1343 = vld [vmem:[%s415 + $0x1c] sm:$0xf]
          %v1344 = vld [vmem:[%s415 + $0x20] sm:$0xf]
          %v1345 = vld [vmem:[%s415 + $0x24] sm:$0xf]
          %v1346 = vld [vmem:[%s415 + $0x28] sm:$0xf]
          %v1347 = vld [vmem:[%s415 + $0x2c] sm:$0xf]
          %v1348 = vld [vmem:[%s415 + $0x30] sm:$0xf]
          %v1349 = vld [vmem:[%s415 + $0x34] sm:$0xf]
          %v1350 = vld [vmem:[%s415 + $0x38] sm:$0xf]
          %v1351 = vld [vmem:[%s415 + $0x3c] sm:$0xf]
          %v1352 = vld [vmem:[%s475] sm:$0x1]
          %v1354 = vlaneseq
          %v1355 = vshrl.u32 %v1354, 7
          %v1356 = vsub.s32 0, %v1355
          %v1357 = vrot.slane %v1352, %v1356
          %v1375 = vunpack.c.l.b16 %v1336
          %v1376 = vunpack.c.l.b16 %v1337
          %v1377 = vunpack.c.l.b16 %v1338
          %v1378 = vunpack.c.l.b16 %v1339
          %v1379 = vunpack.c.l.b16 %v1340
          %v1380 = vunpack.c.l.b16 %v1341
          %v1381 = vunpack.c.l.b16 %v1342
          %v1382 = vunpack.c.l.b16 %v1343
          %v1383 = vunpack.c.l.b16 %v1344
          %v1384 = vunpack.c.l.b16 %v1345
          %v1385 = vunpack.c.l.b16 %v1346
          %v1386 = vunpack.c.l.b16 %v1347
          %v1387 = vunpack.c.l.b16 %v1348
          %v1388 = vunpack.c.l.b16 %v1349
          %v1389 = vunpack.c.l.b16 %v1350
          %v1390 = vunpack.c.l.b16 %v1351
          %v1391 = vpack.c.b16 %v1376, %v1375
          %v1392 = vpack.c.b16 %v1378, %v1377
          %v1393 = vpack.c.b16 %v1380, %v1379
          %v1394 = vpack.c.b16 %v1382, %v1381
          %v1395 = vpack.c.b16 %v1384, %v1383
          %v1396 = vpack.c.b16 %v1386, %v1385
          %v1397 = vpack.c.b16 %v1388, %v1387
          %v1398 = vpack.c.b16 %v1390, %v1389
          %1407 = vmatprep.subr.bf16.mxu0 0
          %1408 = vmatpush1.bf16.msra.mxu0 %v1391
          %1409 = vmatprep.subr.bf16.mxu0 0
          %1410 = vmatpush1.bf16.msra.mxu0 %v1392
          %1411 = vmatprep.subr.bf16.mxu0 0
          %1412 = vmatpush1.bf16.msra.mxu0 %v1393
          %1413 = vmatprep.subr.bf16.mxu0 0
          %1414 = vmatpush1.bf16.msra.mxu0 %v1394
          %1415 = vmatprep.subr.bf16.mxu0 0
          %1416 = vmatpush1.bf16.msra.mxu0 %v1395
          %1417 = vmatprep.subr.bf16.mxu0 0
          %1418 = vmatpush1.bf16.msra.mxu0 %v1396
          %1419 = vmatprep.subr.bf16.mxu0 0
          %1420 = vmatpush1.bf16.msra.mxu0 %v1397
          %1421 = vmatprep.subr.bf16.mxu0 0
          %1422 = vmatpush1.bf16.msra.mxu0 %v1398
          %1423 = vmatprep.subr.bf16.mxu0 0
          %1424 = vmatpush1.bf16.msra.mxu0 0
          %1425 = vmatprep.subr.bf16.mxu0 0
          %1426 = vmatpush1.bf16.msra.mxu0 0
          %1427 = vmatprep.subr.bf16.mxu0 0
          %1428 = vmatpush1.bf16.msra.mxu0 0
          %1429 = vmatprep.subr.bf16.mxu0 0
          %1430 = vmatpush1.bf16.msra.mxu0 0
          %1431 = vmatprep.subr.bf16.mxu0 0
          %1432 = vmatpush1.bf16.msra.mxu0 0
          %1433 = vmatprep.subr.bf16.mxu0 0
          %1434 = vmatpush1.bf16.msra.mxu0 0
          %1435 = vmatprep.subr.bf16.mxu0 0
          %1436 = vmatpush1.bf16.msra.mxu0 0
          %1437 = vmatprep.subr.bf16.mxu0 0
          %1438 = vmatpush1.bf16.msra.mxu0 0
          %1439 = vmatprep.mubr.bf16.mxu0 0
          %1440 = vmatmul.mubr.bf16.gmra.mrb[0].mxu0 %v1328
          %v1441 = vpop.f32.mrb[0].mxu0
          %v1442 = vadd.f32 %v1357, %v1441
          %v1443 = vpop.f32.mrb[0].mxu0
          %v1444 = vpop.f32.mrb[0].mxu0
          %v1445 = vadd.f32 %v1357, %v1444
          %v1446 = vpop.f32.mrb[0].mxu0
          %1447 = vmatprep.mubr.bf16.mxu0 0
          %1448 = vmatmul.mubr.bf16.gmra.mrb[0].mxu0 %v1329
          %v1449 = vpop.f32.mrb[0].mxu0
          %v1450 = vadd.f32 %v1357, %v1449
          %v1451 = vpop.f32.mrb[0].mxu0
          %v1452 = vpop.f32.mrb[0].mxu0
          %v1453 = vadd.f32 %v1357, %v1452
          %v1454 = vpop.f32.mrb[0].mxu0
          %1455 = vmatprep.mubr.bf16.mxu0 0
          %1456 = vmatmul.mubr.bf16.gmra.mrb[0].mxu0 %v1330
          %v1457 = vpop.f32.mrb[0].mxu0
          %v1458 = vadd.f32 %v1357, %v1457
          %v1459 = vpop.f32.mrb[0].mxu0
          %v1460 = vpop.f32.mrb[0].mxu0
          %v1461 = vadd.f32 %v1357, %v1460
          %v1462 = vpop.f32.mrb[0].mxu0
          %1463 = vmatprep.mubr.bf16.mxu0 0
          %1464 = vmatmul.mubr.bf16.gmra.mrb[0].mxu0 %v1331
          %v1465 = vpop.f32.mrb[0].mxu0
          %v1466 = vadd.f32 %v1357, %v1465
          %v1467 = vpop.f32.mrb[0].mxu0
          %v1468 = vpop.f32.mrb[0].mxu0
          %v1469 = vadd.f32 %v1357, %v1468
          %v1470 = vpop.f32.mrb[0].mxu0
          %1471 = vmatprep.mubr.bf16.mxu0 0
          %1472 = vmatmul.mubr.bf16.gmra.mrb[0].mxu0 %v1332
          %v1473 = vpop.f32.mrb[0].mxu0
          %v1474 = vadd.f32 %v1357, %v1473
          %v1475 = vpop.f32.mrb[0].mxu0
          %v1476 = vpop.f32.mrb[0].mxu0
          %v1477 = vadd.f32 %v1357, %v1476
          %v1478 = vpop.f32.mrb[0].mxu0
          %1479 = vmatprep.mubr.bf16.mxu0 0
          %1480 = vmatmul.mubr.bf16.gmra.mrb[0].mxu0 %v1333
          %v1481 = vpop.f32.mrb[0].mxu0
          %v1482 = vadd.f32 %v1357, %v1481
          %v1483 = vpop.f32.mrb[0].mxu0
          %v1484 = vpop.f32.mrb[0].mxu0
          %v1485 = vadd.f32 %v1357, %v1484
          %v1486 = vpop.f32.mrb[0].mxu0
          %1487 = vmatprep.mubr.bf16.mxu0 0
          %1488 = vmatmul.mubr.bf16.gmra.mrb[0].mxu0 %v1334
          %v1489 = vpop.f32.mrb[0].mxu0
          %v1490 = vadd.f32 %v1357, %v1489
          %v1491 = vpop.f32.mrb[0].mxu0
          %v1492 = vpop.f32.mrb[0].mxu0
          %v1493 = vadd.f32 %v1357, %v1492
          %v1494 = vpop.f32.mrb[0].mxu0
          %1495 = vmatprep.mubr.bf16.mxu0 0
          %1496 = vmatmul.mubr.bf16.gmra.mrb[0].mxu0 %v1335
          %v1497 = vpop.f32.mrb[0].mxu0
          %v1498 = vadd.f32 %v1357, %v1497
          %v1499 = vpop.f32.mrb[0].mxu0
          %v1500 = vpop.f32.mrb[0].mxu0
          %v1501 = vadd.f32 %v1357, %v1500
          %v1502 = vpop.f32.mrb[0].mxu0
          %1503 = vdwg.mxu0
          %v1504 = vmax.f32 %v1442, 0.0
          %v1505 = vmax.f32 %v1445, 0.0
          %v1506 = vmax.f32 %v1450, 0.0
          %v1507 = vmax.f32 %v1453, 0.0
          %v1508 = vmax.f32 %v1458, 0.0
          %v1509 = vmax.f32 %v1461, 0.0
          %v1510 = vmax.f32 %v1466, 0.0
          %v1511 = vmax.f32 %v1469, 0.0
          %v1512 = vmax.f32 %v1474, 0.0
          %v1513 = vmax.f32 %v1477, 0.0
          %v1514 = vmax.f32 %v1482, 0.0
          %v1515 = vmax.f32 %v1485, 0.0
          %v1516 = vmax.f32 %v1490, 0.0
          %v1517 = vmax.f32 %v1493, 0.0
          %v1518 = vmax.f32 %v1498, 0.0
          %v1519 = vmax.f32 %v1501, 0.0
          %v1520 = vpack.c.bf16 %v1505, %v1504
          %v1521 = vpack.c.bf16 %v1507, %v1506
          %v1522 = vpack.c.bf16 %v1509, %v1508
          %v1523 = vpack.c.bf16 %v1511, %v1510
          %v1524 = vpack.c.bf16 %v1513, %v1512
          %v1525 = vpack.c.bf16 %v1515, %v1514
          %v1526 = vpack.c.bf16 %v1517, %v1516
          %v1527 = vpack.c.bf16 %v1519, %v1518
          %s1528 = smul.u32 %s34, 128
          // Predicated region
          $region105: #{tpu_custom_call.1} parent=103 // pred_check
            %p1529 = pneg %p505
          $region106: #{tpu_custom_call.1} parent=103 // pred_check_branch
            %1531 = sbr.rel (%p1529) target = $region108
          $region107: #{tpu_custom_call.1} parent=103 // pred_region
            %s1532 = sshra.s32 %s1528, 4
            %s1533 = sand.u32 %s1528, 15
            %s1534 = smul.addr %s1532, 8
            %s1535 = scalar_lea.vmem [#allocation3], %s1534
            %1536 = vst [vmem:[%s1535] sm:$0xff] %v1520
            %1537 = vst [vmem:[%s1535 + $0x8] sm:$0xff] %v1521
            %1538 = vst [vmem:[%s1535 + $0x10] sm:$0xff] %v1522
            %1539 = vst [vmem:[%s1535 + $0x18] sm:$0xff] %v1523
            %1540 = vst [vmem:[%s1535 + $0x20] sm:$0xff] %v1524
            %1541 = vst [vmem:[%s1535 + $0x28] sm:$0xff] %v1525
            %1542 = vst [vmem:[%s1535 + $0x30] sm:$0xff] %v1526
            %1543 = vst [vmem:[%s1535 + $0x38] sm:$0xff] %v1527
          $region108: #{tpu_custom_call.1} parent=103 // pred_fallthru
            _
          // Predicated region
          $region109: #{tpu_custom_call.1} parent=103 // pred_check
            %p1544 = pneg %p930
          $region110: #{tpu_custom_call.1} parent=103 // pred_check_branch
            %1546 = sbr.rel (%p1544) target = $region112
          $region111: #{tpu_custom_call.1} parent=103 // pred_region
            %s1547 = sshra.s32 %s1528, 4
            %s1548 = sand.u32 %s1528, 15
            %s1549 = smul.addr %s1547, 8
            %s1550 = scalar_lea.vmem [#allocation2], %s1549
            %1551 = vst [vmem:[%s1550] sm:$0xff] %v1520
            %1552 = vst [vmem:[%s1550 + $0x8] sm:$0xff] %v1521
            %1553 = vst [vmem:[%s1550 + $0x10] sm:$0xff] %v1522
            %1554 = vst [vmem:[%s1550 + $0x18] sm:$0xff] %v1523
            %1555 = vst [vmem:[%s1550 + $0x20] sm:$0xff] %v1524
            %1556 = vst [vmem:[%s1550 + $0x28] sm:$0xff] %v1525
            %1557 = vst [vmem:[%s1550 + $0x30] sm:$0xff] %v1526
            %1558 = vst [vmem:[%s1550 + $0x38] sm:$0xff] %v1527
          $region112: #{tpu_custom_call.1} parent=103 // pred_fallthru
            _
          %p1559 = scmp.eq.s32.totalorder %s33, 2
          // Predicated region
          $region113: #{tpu_custom_call.1} parent=103 // pred_check
            %p1560 = pneg %p1559
          $region114: #{tpu_custom_call.1} parent=103 // pred_check_branch
            %1562 = sbr.rel (%p1560) target = $region116
          $region115: #{tpu_custom_call.1} parent=103 // pred_region
            %v1563 = vld [vmem:[%s479] sm:$0xff]
            %1564 = vmatprep.subr.mxu0 0.0
            %1565 = vmatpush1.msra.mxu0 %v1504
            %1566 = vmatprep.subr.mxu0 0.0
            %1567 = vmatpush1.msra.mxu0 %v1505
            %1568 = vmatprep.subr.mxu0 0.0
            %1569 = vmatpush1.msra.mxu0 %v1506
            %1570 = vmatprep.subr.mxu0 0.0
            %1571 = vmatpush1.msra.mxu0 %v1507
            %1572 = vmatprep.subr.mxu0 0.0
            %1573 = vmatpush1.msra.mxu0 %v1508
            %1574 = vmatprep.subr.mxu0 0.0
            %1575 = vmatpush1.msra.mxu0 %v1509
            %1576 = vmatprep.subr.mxu0 0.0
            %1577 = vmatpush1.msra.mxu0 %v1510
            %1578 = vmatprep.subr.mxu0 0.0
            %1579 = vmatpush1.msra.mxu0 %v1511
            %1580 = vmatprep.subr.mxu0 0.0
            %1581 = vmatpush1.msra.mxu0 %v1512
            %1582 = vmatprep.subr.mxu0 0.0
            %1583 = vmatpush1.msra.mxu0 %v1513
            %1584 = vmatprep.subr.mxu0 0.0
            %1585 = vmatpush1.msra.mxu0 %v1514
            %1586 = vmatprep.subr.mxu0 0.0
            %1587 = vmatpush1.msra.mxu0 %v1515
            %1588 = vmatprep.subr.mxu0 0.0
            %1589 = vmatpush1.msra.mxu0 %v1516
            %1590 = vmatprep.subr.mxu0 0.0
            %1591 = vmatpush1.msra.mxu0 %v1517
            %1592 = vmatprep.subr.mxu0 0.0
            %1593 = vmatpush1.msra.mxu0 %v1518
            %1594 = vmatprep.subr.mxu0 0.0
            %1595 = vmatpush1.msra.mxu0 %v1519
            %1596 = vmatprep.subr.mxu0 0.0
            %1597 = vmatpush1.msra.mxu0 0.0
            %1598 = vmatprep.subr.mxu0 0.0
            %1599 = vmatpush1.msra.mxu0 0.0
            %1600 = vmatprep.subr.mxu0 0.0
            %1601 = vmatpush1.msra.mxu0 0.0
            %1602 = vmatprep.subr.mxu0 0.0
            %1603 = vmatpush1.msra.mxu0 0.0
            %1604 = vmatprep.subr.mxu0 0.0
            %1605 = vmatpush1.msra.mxu0 0.0
            %1606 = vmatprep.subr.mxu0 0.0
            %1607 = vmatpush1.msra.mxu0 0.0
            %1608 = vmatprep.subr.mxu0 0.0
            %1609 = vmatpush1.msra.mxu0 0.0
            %1610 = vmatprep.subr.mxu0 0.0
            %1611 = vmatpush1.msra.mxu0 0.0
            %1612 = vmatprep.subr.mxu0 0.0
            %1613 = vmatpush1.msra.mxu0 0.0
            %1614 = vmatprep.subr.mxu0 0.0
            %1615 = vmatpush1.msra.mxu0 0.0
            %1616 = vmatprep.subr.mxu0 0.0
            %1617 = vmatpush1.msra.mxu0 0.0
            %1618 = vmatprep.subr.mxu0 0.0
            %1619 = vmatpush1.msra.mxu0 0.0
            %1620 = vmatprep.subr.mxu0 0.0
            %1621 = vmatpush1.msra.mxu0 0.0
            %1622 = vmatprep.subr.mxu0 0.0
            %1623 = vmatpush1.msra.mxu0 0.0
            %1624 = vmatprep.subr.mxu0 0.0
            %1625 = vmatpush1.msra.mxu0 0.0
            %1626 = vmatprep.subr.mxu0 0.0
            %1627 = vmatpush1.msra.mxu0 0.0
            %1628 = vmatprep.mubr.f32.mxu0 0.0
            %1629 = vmatmul.mubr.f32.gmra.mrb[0].mxu0 %v1563
            %v1630 = vpop.f32.mrb[0].mxu0
            %v1631 = vadd.f32 0.0, %v1630
            %v1632 = vpop.f32.mrb[0].mxu0
            %1633 = vdwg.mxu0
            %p1634 = scmp.eq.s32.totalorder %s34, 0
            // Predicated region
            $region117: #{tpu_custom_call.1} parent=115 // pred_check
              %p1635 = pneg %p1634
            $region118: #{tpu_custom_call.1} parent=115 // pred_check_branch
              %1637 = sbr.rel (%p1635) target = $region120
            $region119: #{tpu_custom_call.1} parent=115 // pred_region
              %1638 = vst [vmem:[#allocation13] sm:$0xff] %v1631
            $region120: #{tpu_custom_call.1} parent=115 // pred_fallthru
              _
            %p1639 = scmp.ne.s32.totalorder %s34, 0
            // Predicated region
            $region121: #{tpu_custom_call.1} parent=115 // pred_check
              %p1640 = pneg %p1639
            $region122: #{tpu_custom_call.1} parent=115 // pred_check_branch
              %1642 = sbr.rel (%p1640) target = $region124
            $region123: #{tpu_custom_call.1} parent=115 // pred_region
              %v1643 = vld [vmem:[#allocation13] sm:$0xff]
              %v1644 = vadd.f32 %v1643, %v1631
              %1645 = vst [vmem:[#allocation13] sm:$0xff] %v1644
            $region124: #{tpu_custom_call.1} parent=115 // pred_fallthru
              _
          $region116: #{tpu_custom_call.1} parent=103 // pred_fallthru
            _
        $region104: #{tpu_custom_call.1} parent=47 // pred_fallthru
          _
        // Predicated region
        $region125: #{tpu_custom_call.1} parent=47 // pred_check
          %p1646 = pneg %p248
        $region126: #{tpu_custom_call.1} parent=47 // pred_check_branch
          %1648 = sbr.rel (%p1646) target = $region128
        $region127: #{tpu_custom_call.1} parent=47 // pred_region
          %s1650 = ssub.s32 128, 128
          %1651 = vsyncadd [#allocation7], %s1650
          %s1653 = sshll.u32 [#allocation13], 4
          %s1654 = int_to_ptr.vmem [resolvable:$true] %s1653
          %1656 = dma.vmem_to_hbm [thread:$0]  %s1654, 128, %s7, [#allocation7]
        $region128: #{tpu_custom_call.1} parent=47 // pred_fallthru
          _
        // Predicated region
        $region129: #{tpu_custom_call.1} parent=47 // pred_check
          %p1657 = pneg %p248
        $region130: #{tpu_custom_call.1} parent=47 // pred_check_branch
          %1659 = sbr.rel (%p1657) target = $region132
        $region131: #{tpu_custom_call.1} parent=47 // pred_region
          %1660 = dma.done [#allocation7], 128
        $region132: #{tpu_custom_call.1} parent=47 // pred_fallthru
          _
      $region48: #{tpu_custom_call.1} parent=5 // pred_fallthru
        _
      %p1661 = scmp.le.s32.totalorder 2, %s23
      // Predicated region
      $region133: #{tpu_custom_call.1} parent=5 // pred_check
        %p1662 = pneg %p1661
      $region134: #{tpu_custom_call.1} parent=5 // pred_check_branch
        %1664 = sbr.rel (%p1662) target = $region136
      $region135: #{tpu_custom_call.1} parent=5 // pred_region
        %s1665 = ssub.s32 %s23, 2
      $region136: #{tpu_custom_call.1} parent=5 // pred_fallthru
        _
    $region6: #{tpu_custom_call.1} parent=1 // loop_footer
      %s27 = sadd.s32 1, %s23
    $region7: #{tpu_custom_call.1} parent=1 // loop_footer_branch
      %22 = sbr.rel target = $region3
    $region8: #{tpu_custom_call.1} parent=1 // loop_exit
      _
    %1666 = vsyncpa [#allocation6], 1
    %s1667 = scalar_lea.sflag [#allocation6], 1
    %1668 = vsyncpa %s1667, 1
    %1669 = vsyncpa [#allocation9], 1
    %s1670 = scalar_lea.sflag [#allocation9], 1
    %1671 = vsyncpa %s1670, 1
    %1672 = vsyncpa [#allocation12], 1
    %s1673 = scalar_lea.sflag [#allocation12], 1
    %1674 = vsyncpa %s1673, 1
    %1675 = vsyncpa [#allocation7], 1
    %s1676 = scalar_lea.sflag [#allocation7], 1
    %1677 = vsyncpa %s1676, 1

</llo_original>
